<compile_context>
chip_gen: v6e
topology: v6e:2x2x1
jax: 0.10.0
libtpu: 0.0.40
codegen_flags: <defaults>
</compile_context>

<pallas_src>
import math
from functools import partial

import jax
import jax.numpy as jnp
from jax.experimental import pallas as pl
from jax.experimental.pallas import tpu as pltpu

HID = 128          # hidden_size (module default)
HEADS = 8          # nn.MultiheadAttention num_heads
DH = HID // HEADS  # 16
EPS = 1e-5         # nn.LayerNorm default eps


# ----------------------------------------------------------------------------
# In-kernel helpers (f32 everywhere — VPU/EUP math stays full precision)
# ----------------------------------------------------------------------------
def _layernorm(y, gamma, beta):
    mean = jnp.mean(y, axis=-1, keepdims=True)
    var = jnp.mean((y - mean) ** 2, axis=-1, keepdims=True)
    return (y - mean) * jax.lax.rsqrt(var + EPS) * gamma + beta


# ----------------------------------------------------------------------------
# Fused TransformerLayer kernel (one batch element / grid step)
# ----------------------------------------------------------------------------
def transformer_layer_kernel(x_ref, wqkv_ref, bqkv_ref, wo_ref, bo_ref,
                             g1_ref, be1_ref, wl_ref, bl_ref, g2_ref, be2_ref,
                             o_ref, *, num_heads):
    x = x_ref[0]                                              # (S, H) f32
    S, H = x.shape
    dh = H // num_heads
    scale = 1.0 / math.sqrt(dh)

    # ---- fused, lane-dense QKV projection: (S,128) @ (128,384) -------------
    qkv = jnp.dot(x.astype(jnp.bfloat16), wqkv_ref[...],
                  preferred_element_type=jnp.float32) + bqkv_ref[...]  # (S, 3H) f32

    q = (qkv[:, 0:H] * scale).astype(jnp.bfloat16)            # scale folded into q
    k = qkv[:, H:2 * H].astype(jnp.bfloat16)
    v = qkv[:, 2 * H:3 * H].astype(jnp.bfloat16)

    # head split: (S, H) -> (nh, S, dh)  (static lane slices + stack; XLU work,
    # MXU stays the binding unit)
    def split_heads(t):
        return jnp.stack([t[:, h * dh:(h + 1) * dh] for h in range(num_heads)],
                         axis=0)

    qh = split_heads(q)                                       # (nh, S, dh) bf16
    kh = split_heads(k)
    vh = split_heads(v)

    # ---- attention: batched per-head matmuls, softmax in f32 ----------------
    s = jnp.einsum('hqd,hkd->hqk', qh, kh,
                   preferred_element_type=jnp.float32)        # (nh, S, S) f32
    s = s - jnp.max(s, axis=-1, keepdims=True)
    p = jnp.exp(s)
    denom = jnp.sum(p, axis=-1, keepdims=True)                # (nh, S, 1)

    ctx = jnp.einsum('hqk,hkd->hqd', p.astype(jnp.bfloat16), vh,
                     preferred_element_type=jnp.float32)      # (nh, S, dh) f32
    # normalizer applied to ctx (S*dh) instead of p (S*S); reciprocal on EUP slot
    ctx = ctx * pl.reciprocal(denom, approx=True)

    # head -> lane reassembly, then ONE lane-dense (S,128)@(128,128) out-proj
    ctx_flat = jnp.concatenate([ctx[h] for h in range(num_heads)], axis=-1)  # (S, H)
    attn = jnp.dot(ctx_flat.astype(jnp.bfloat16), wo_ref[...],
                   preferred_element_type=jnp.float32) + bo_ref[...]

    # ---- LN1 -> Linear -> LN2 (residuals as in the reference module) --------
    y = _layernorm(attn + x, g1_ref[...], be1_ref[...])
    y1 = jnp.dot(y.astype(jnp.bfloat16), wl_ref[...],
                 preferred_element_type=jnp.float32) + bl_ref[...]
    o_ref[0] = _layernorm(y1 + y, g2_ref[...], be2_ref[...])


# ----------------------------------------------------------------------------
# Wrapper: fuse/ cast weights outside the kernel, grid over the batch axis
# ----------------------------------------------------------------------------
def transformer_layer(x, p):
    """x: (B, S, H) f32 — B independent sequences (equivalent to torch's
    (L, N, E) MultiheadAttention input, transposed to batch-major).

    Weight convention: 'x @ W + b' style, i.e. W = (torch weight).T .
    """
    B, S, H = x.shape
    nh = HEADS

    # One-time layout/precision work in plain JAX (outside the kernel).
    wqkv = jnp.concatenate([p["wq"], p["wk"], p["wv"]], axis=1).astype(jnp.bfloat16)  # (H, 3H)
    bqkv = jnp.concatenate([p["bq"], p["bk"], p["bv"]], axis=0).reshape(1, 3 * H)     # f32
    wo = p["wo"].astype(jnp.bfloat16)                                                 # (H, H)
    wl = p["wl"].astype(jnp.bfloat16)                                                 # (H, H)

    args = (x, wqkv, bqkv, wo,
            p["bo"].reshape(1, H),
            p["g1"].reshape(1, H), p["be1"].reshape(1, H),
            wl,
            p["bl"].reshape(1, H),
            p["g2"].reshape(1, H), p["be2"].reshape(1, H))

    def const_spec(shape):               # whole-array block, VMEM-resident across grid
        n = len(shape)
        return pl.BlockSpec(shape, lambda b, n=n: (0,) * n)

    x_spec = pl.BlockSpec((1, S, H), lambda b: (b, 0, 0))
    in_specs = [x_spec] + [const_spec(a.shape) for a in args[1:]]

    return pl.pallas_call(
        partial(transformer_layer_kernel, num_heads=nh),
        out_shape=jax.ShapeDtypeStruct((B, S, H), jnp.float32),
        grid=(B,),
        in_specs=in_specs,
        out_specs=pl.BlockSpec((1, S, H), lambda b: (b, 0, 0)),
        compiler_params=pltpu.CompilerParams(
            dimension_semantics=("parallel",),
            vmem_limit_bytes=32 * 1024 * 1024,   # safe on v5e/v6e (128 MiB) and v7x (64 MiB)
        ),
    )(*args)


# ----------------------------------------------------------------------------
# Pure-JAX f32 reference (for the correctness check in __main__)
# ----------------------------------------------------------------------------
def transformer_layer_ref(x, p):
    S, H = x.shape
    nh, dh = HEADS, H // HEADS
    q = x @ p["wq"] + p["bq"]
    k = x @ p["wk"] + p["bk"]
    v = x @ p["wv"] + p["bv"]
    qh = q.reshape(S, nh, dh).transpose(1, 0, 2)
    kh = k.reshape(S, nh, dh).transpose(1, 0, 2)
    vh = v.reshape(S, nh, dh).transpose(1, 0, 2)
    s = jnp.einsum('hqd,hkd->hqk', qh, kh) / math.sqrt(dh)
    pr = jax.nn.softmax(s, axis=-1)
    ctx = jnp.einsum('hqk,hkd->hqd', pr, vh)                 # (nh, S, dh)
    attn = ctx.transpose(1, 0, 2).reshape(S, H) @ p["wo"] + p["bo"]

    def ln(z, g, b):
        m = z.mean(-1, keepdims=True)
        var = ((z - m) ** 2).mean(-1, keepdims=True)
        return (z - m) / jnp.sqrt(var + EPS) * g + b

    y = ln(attn + x, p["g1"], p["be1"])
    y1 = y @ p["wl"] + p["bl"]
    return ln(y1 + y, p["g2"], p["be2"])


# ----------------------------------------------------------------------------
if __name__ == "__main__":
    B, S = 4, 8   # small batch of short sequences; hidden = module default 128

    key = jax.random.PRNGKey(0)
    ks = jax.random.split(key, 16)
    x = jax.random.normal(ks[0], (B, S, HID), jnp.float32)

    def w(i, shape, sc=0.05):
        return sc * jax.random.normal(ks[i], shape, jnp.float32)

    params = dict(
        wq=w(1, (HID, HID)), bq=w(6, (HID,), 0.01),
        wk=w(2, (HID, HID)), bk=w(7, (HID,), 0.01),
        wv=w(3, (HID, HID)), bv=w(8, (HID,), 0.01),
        wo=w(4, (HID, HID)), bo=w(9, (HID,), 0.01),
        g1=jnp.ones((HID,), jnp.float32), be1=jnp.zeros((HID,), jnp.float32),
        wl=w(5, (HID, HID)), bl=w(10, (HID,), 0.01),
        g2=jnp.ones((HID,), jnp.float32), be2=jnp.zeros((HID,), jnp.float32),
    )

    fwd = jax.jit(transformer_layer)
    out = jax.block_until_ready(fwd(x, params))

    assert out.shape == (B, S, HID), out.shape
    assert bool(jnp.all(jnp.isfinite(out)))

    # f32 reference; bf16 matmul operands + approx reciprocal loosen numerics a
    # little, so compare with a tolerance that still catches layout/math bugs.
    ref = jax.vmap(lambda xb: transformer_layer_ref(xb, params))(x)
    err = float(jnp.max(jnp.abs(out - ref)))
    assert err < 5e-2, f"max abs err vs reference: {err}"

    print("KERNEL_OK")
</pallas_src>

<mosaic_0001>
module attributes {stable_mosaic.version = 11 : i64} {
  func.func @transformer_layer_kernel(%arg0: i32, %arg1: memref<1x8x128xf32, #tpu.memory_space<vmem>>, %arg2: memref<128x384xbf16, #tpu.memory_space<vmem>>, %arg3: memref<1x384xf32, #tpu.memory_space<vmem>>, %arg4: memref<128x128xbf16, #tpu.memory_space<vmem>>, %arg5: memref<1x128xf32, #tpu.memory_space<vmem>>, %arg6: memref<1x128xf32, #tpu.memory_space<vmem>>, %arg7: memref<1x128xf32, #tpu.memory_space<vmem>>, %arg8: memref<128x128xbf16, #tpu.memory_space<vmem>>, %arg9: memref<1x128xf32, #tpu.memory_space<vmem>>, %arg10: memref<1x128xf32, #tpu.memory_space<vmem>>, %arg11: memref<1x128xf32, #tpu.memory_space<vmem>>, %arg12: memref<1x8x128xf32, #tpu.memory_space<vmem>>) attributes {dimension_semantics = [#tpu.dimension_semantics<parallel>], iteration_bounds = array<i64: 4>, scalar_prefetch = 0 : i64, scratch_operands = 0 : i64, tpu.core_type = #tpu.core_type<tc>, window_params = [{transform_indices = @transform_0, window_bounds = array<i64: 1, 8, 128>}, {pipeline_mode = #tpu.pipeline_mode<synchronous>, transform_indices = @transform_1, window_bounds = array<i64: 128, 384>}, {pipeline_mode = #tpu.pipeline_mode<synchronous>, transform_indices = @transform_2, window_bounds = array<i64: 1, 384>}, {pipeline_mode = #tpu.pipeline_mode<synchronous>, transform_indices = @transform_3, window_bounds = array<i64: 128, 128>}, {pipeline_mode = #tpu.pipeline_mode<synchronous>, transform_indices = @transform_4, window_bounds = array<i64: 1, 128>}, {pipeline_mode = #tpu.pipeline_mode<synchronous>, transform_indices = @transform_5, window_bounds = array<i64: 1, 128>}, {pipeline_mode = #tpu.pipeline_mode<synchronous>, transform_indices = @transform_6, window_bounds = array<i64: 1, 128>}, {pipeline_mode = #tpu.pipeline_mode<synchronous>, transform_indices = @transform_7, window_bounds = array<i64: 128, 128>}, {pipeline_mode = #tpu.pipeline_mode<synchronous>, transform_indices = @transform_8, window_bounds = array<i64: 1, 128>}, {pipeline_mode = #tpu.pipeline_mode<synchronous>, transform_indices = @transform_9, window_bounds = array<i64: 1, 128>}, {pipeline_mode = #tpu.pipeline_mode<synchronous>, transform_indices = @transform_10, window_bounds = array<i64: 1, 128>}, {transform_indices = @transform_11, window_bounds = array<i64: 1, 8, 128>}]} {
    %c0 = arith.constant 0 : index
    %c0_0 = arith.constant 0 : index
    %c0_1 = arith.constant 0 : index
    %0 = vector.load %arg1[%c0, %c0_0, %c0_1] : memref<1x8x128xf32, #tpu.memory_space<vmem>>, vector<1x8x128xf32>
    %1 = vector.shape_cast %0 : vector<1x8x128xf32> to vector<8x128xf32>
    %2 = arith.truncf %1 : vector<8x128xf32> to vector<8x128xbf16>
    %c0_2 = arith.constant 0 : index
    %c0_3 = arith.constant 0 : index
    %3 = vector.load %arg2[%c0_2, %c0_3] : memref<128x384xbf16, #tpu.memory_space<vmem>>, vector<128x384xbf16>
    %cst = arith.constant dense<0.000000e+00> : vector<8x384xf32>
    %4 = tpu.matmul %2, %3, %cst {dimension_numbers = #tpu.dot_dimension_numbers<[1], [0], [0], [1], [0, 0, 1, 1], [], []>} : vector<8x128xbf16>, vector<128x384xbf16>, vector<8x384xf32> -> vector<8x384xf32>
    %c0_4 = arith.constant 0 : index
    %c0_5 = arith.constant 0 : index
    %5 = vector.load %arg3[%c0_4, %c0_5] : memref<1x384xf32, #tpu.memory_space<vmem>>, vector<1x384xf32>
    %6 = vector.broadcast %5 : vector<1x384xf32> to vector<8x384xf32>
    %7 = arith.addf %4, %6 : vector<8x384xf32>
    %8 = vector.extract_strided_slice %7 {offsets = [0, 0], sizes = [8, 128], strides = [1, 1]} : vector<8x384xf32> to vector<8x128xf32>
    %cst_6 = arith.constant 2.500000e-01 : f32
    %9 = vector.broadcast %cst_6 : f32 to vector<8x128xf32>
    %10 = arith.mulf %8, %9 : vector<8x128xf32>
    %11 = arith.truncf %10 : vector<8x128xf32> to vector<8x128xbf16>
    %12 = vector.extract_strided_slice %7 {offsets = [0, 128], sizes = [8, 128], strides = [1, 1]} : vector<8x384xf32> to vector<8x128xf32>
    %13 = arith.truncf %12 : vector<8x128xf32> to vector<8x128xbf16>
    %14 = vector.extract_strided_slice %7 {offsets = [0, 256], sizes = [8, 128], strides = [1, 1]} : vector<8x384xf32> to vector<8x128xf32>
    %15 = arith.truncf %14 : vector<8x128xf32> to vector<8x128xbf16>
    %16 = vector.extract_strided_slice %11 {offsets = [0, 0], sizes = [8, 16], strides = [1, 1]} : vector<8x128xbf16> to vector<8x16xbf16>
    %17 = vector.extract_strided_slice %11 {offsets = [0, 16], sizes = [8, 16], strides = [1, 1]} : vector<8x128xbf16> to vector<8x16xbf16>
    %18 = vector.extract_strided_slice %11 {offsets = [0, 32], sizes = [8, 16], strides = [1, 1]} : vector<8x128xbf16> to vector<8x16xbf16>
    %19 = vector.extract_strided_slice %11 {offsets = [0, 48], sizes = [8, 16], strides = [1, 1]} : vector<8x128xbf16> to vector<8x16xbf16>
    %20 = vector.extract_strided_slice %11 {offsets = [0, 64], sizes = [8, 16], strides = [1, 1]} : vector<8x128xbf16> to vector<8x16xbf16>
    %21 = vector.extract_strided_slice %11 {offsets = [0, 80], sizes = [8, 16], strides = [1, 1]} : vector<8x128xbf16> to vector<8x16xbf16>
    %22 = vector.extract_strided_slice %11 {offsets = [0, 96], sizes = [8, 16], strides = [1, 1]} : vector<8x128xbf16> to vector<8x16xbf16>
    %23 = vector.extract_strided_slice %11 {offsets = [0, 112], sizes = [8, 16], strides = [1, 1]} : vector<8x128xbf16> to vector<8x16xbf16>
    %24 = vector.shape_cast %16 : vector<8x16xbf16> to vector<1x8x16xbf16>
    %25 = vector.shape_cast %17 : vector<8x16xbf16> to vector<1x8x16xbf16>
    %26 = vector.shape_cast %18 : vector<8x16xbf16> to vector<1x8x16xbf16>
    %27 = vector.shape_cast %19 : vector<8x16xbf16> to vector<1x8x16xbf16>
    %28 = vector.shape_cast %20 : vector<8x16xbf16> to vector<1x8x16xbf16>
    %29 = vector.shape_cast %21 : vector<8x16xbf16> to vector<1x8x16xbf16>
    %30 = vector.shape_cast %22 : vector<8x16xbf16> to vector<1x8x16xbf16>
    %31 = vector.shape_cast %23 : vector<8x16xbf16> to vector<1x8x16xbf16>
    %32 = tpu.concatenate %24, %25, %26, %27, %28, %29, %30, %31 in 0 : vector<1x8x16xbf16>, vector<1x8x16xbf16>, vector<1x8x16xbf16>, vector<1x8x16xbf16>, vector<1x8x16xbf16>, vector<1x8x16xbf16>, vector<1x8x16xbf16>, vector<1x8x16xbf16> -> vector<8x8x16xbf16>
    %33 = vector.extract_strided_slice %13 {offsets = [0, 0], sizes = [8, 16], strides = [1, 1]} : vector<8x128xbf16> to vector<8x16xbf16>
    %34 = vector.extract_strided_slice %13 {offsets = [0, 16], sizes = [8, 16], strides = [1, 1]} : vector<8x128xbf16> to vector<8x16xbf16>
    %35 = vector.extract_strided_slice %13 {offsets = [0, 32], sizes = [8, 16], strides = [1, 1]} : vector<8x128xbf16> to vector<8x16xbf16>
    %36 = vector.extract_strided_slice %13 {offsets = [0, 48], sizes = [8, 16], strides = [1, 1]} : vector<8x128xbf16> to vector<8x16xbf16>
    %37 = vector.extract_strided_slice %13 {offsets = [0, 64], sizes = [8, 16], strides = [1, 1]} : vector<8x128xbf16> to vector<8x16xbf16>
    %38 = vector.extract_strided_slice %13 {offsets = [0, 80], sizes = [8, 16], strides = [1, 1]} : vector<8x128xbf16> to vector<8x16xbf16>
    %39 = vector.extract_strided_slice %13 {offsets = [0, 96], sizes = [8, 16], strides = [1, 1]} : vector<8x128xbf16> to vector<8x16xbf16>
    %40 = vector.extract_strided_slice %13 {offsets = [0, 112], sizes = [8, 16], strides = [1, 1]} : vector<8x128xbf16> to vector<8x16xbf16>
    %41 = vector.shape_cast %33 : vector<8x16xbf16> to vector<1x8x16xbf16>
    %42 = vector.shape_cast %34 : vector<8x16xbf16> to vector<1x8x16xbf16>
    %43 = vector.shape_cast %35 : vector<8x16xbf16> to vector<1x8x16xbf16>
    %44 = vector.shape_cast %36 : vector<8x16xbf16> to vector<1x8x16xbf16>
    %45 = vector.shape_cast %37 : vector<8x16xbf16> to vector<1x8x16xbf16>
    %46 = vector.shape_cast %38 : vector<8x16xbf16> to vector<1x8x16xbf16>
    %47 = vector.shape_cast %39 : vector<8x16xbf16> to vector<1x8x16xbf16>
    %48 = vector.shape_cast %40 : vector<8x16xbf16> to vector<1x8x16xbf16>
    %49 = tpu.concatenate %41, %42, %43, %44, %45, %46, %47, %48 in 0 : vector<1x8x16xbf16>, vector<1x8x16xbf16>, vector<1x8x16xbf16>, vector<1x8x16xbf16>, vector<1x8x16xbf16>, vector<1x8x16xbf16>, vector<1x8x16xbf16>, vector<1x8x16xbf16> -> vector<8x8x16xbf16>
    %50 = vector.extract_strided_slice %15 {offsets = [0, 0], sizes = [8, 16], strides = [1, 1]} : vector<8x128xbf16> to vector<8x16xbf16>
    %51 = vector.extract_strided_slice %15 {offsets = [0, 16], sizes = [8, 16], strides = [1, 1]} : vector<8x128xbf16> to vector<8x16xbf16>
    %52 = vector.extract_strided_slice %15 {offsets = [0, 32], sizes = [8, 16], strides = [1, 1]} : vector<8x128xbf16> to vector<8x16xbf16>
    %53 = vector.extract_strided_slice %15 {offsets = [0, 48], sizes = [8, 16], strides = [1, 1]} : vector<8x128xbf16> to vector<8x16xbf16>
    %54 = vector.extract_strided_slice %15 {offsets = [0, 64], sizes = [8, 16], strides = [1, 1]} : vector<8x128xbf16> to vector<8x16xbf16>
    %55 = vector.extract_strided_slice %15 {offsets = [0, 80], sizes = [8, 16], strides = [1, 1]} : vector<8x128xbf16> to vector<8x16xbf16>
    %56 = vector.extract_strided_slice %15 {offsets = [0, 96], sizes = [8, 16], strides = [1, 1]} : vector<8x128xbf16> to vector<8x16xbf16>
    %57 = vector.extract_strided_slice %15 {offsets = [0, 112], sizes = [8, 16], strides = [1, 1]} : vector<8x128xbf16> to vector<8x16xbf16>
    %58 = vector.shape_cast %50 : vector<8x16xbf16> to vector<1x8x16xbf16>
    %59 = vector.shape_cast %51 : vector<8x16xbf16> to vector<1x8x16xbf16>
    %60 = vector.shape_cast %52 : vector<8x16xbf16> to vector<1x8x16xbf16>
    %61 = vector.shape_cast %53 : vector<8x16xbf16> to vector<1x8x16xbf16>
    %62 = vector.shape_cast %54 : vector<8x16xbf16> to vector<1x8x16xbf16>
    %63 = vector.shape_cast %55 : vector<8x16xbf16> to vector<1x8x16xbf16>
    %64 = vector.shape_cast %56 : vector<8x16xbf16> to vector<1x8x16xbf16>
    %65 = vector.shape_cast %57 : vector<8x16xbf16> to vector<1x8x16xbf16>
    %66 = tpu.concatenate %58, %59, %60, %61, %62, %63, %64, %65 in 0 : vector<1x8x16xbf16>, vector<1x8x16xbf16>, vector<1x8x16xbf16>, vector<1x8x16xbf16>, vector<1x8x16xbf16>, vector<1x8x16xbf16>, vector<1x8x16xbf16>, vector<1x8x16xbf16> -> vector<8x8x16xbf16>
    "tpu.trace_start"() <{level = 10 : i32, message = "hqd,hkd->hqk"}> : () -> ()
    %cst_7 = arith.constant dense<0.000000e+00> : vector<8x8x8xf32>
    %67 = tpu.matmul %32, %49, %cst_7 {dimension_numbers = #tpu.dot_dimension_numbers<[2], [2], [1], [1], [0, 0, 0, 1, 1, 1], [0], [0]>} : vector<8x8x16xbf16>, vector<8x8x16xbf16>, vector<8x8x8xf32> -> vector<8x8x8xf32>
    "tpu.trace_stop"() : () -> ()
    %cst_8 = arith.constant dense<0xFF800000> : vector<8x8xf32>
    %68 = vector.multi_reduction <maximumf>, %67, %cst_8 [2] : vector<8x8x8xf32> to vector<8x8xf32>
    %69 = vector.shape_cast %68 : vector<8x8xf32> to vector<8x8x1xf32>
    %70 = vector.broadcast %69 : vector<8x8x1xf32> to vector<8x8x8xf32>
    %71 = arith.subf %67, %70 : vector<8x8x8xf32>
    %72 = math.exp %71 : vector<8x8x8xf32>
    %cst_9 = arith.constant dense<0.000000e+00> : vector<8x8xf32>
    %73 = vector.multi_reduction <add>, %72, %cst_9 [2] : vector<8x8x8xf32> to vector<8x8xf32>
    %74 = vector.shape_cast %73 : vector<8x8xf32> to vector<8x8x1xf32>
    %75 = arith.truncf %72 : vector<8x8x8xf32> to vector<8x8x8xbf16>
    "tpu.trace_start"() <{level = 10 : i32, message = "hqk,hkd->hqd"}> : () -> ()
    %cst_10 = arith.constant dense<0.000000e+00> : vector<8x8x16xf32>
    %76 = tpu.matmul %75, %66, %cst_10 {dimension_numbers = #tpu.dot_dimension_numbers<[2], [1], [1], [2], [0, 0, 0, 1, 1, 2], [0], [0]>} : vector<8x8x8xbf16>, vector<8x8x16xbf16>, vector<8x8x16xf32> -> vector<8x8x16xf32>
    "tpu.trace_stop"() : () -> ()
    %77 = tpu.reciprocal %74 {approx = true} : vector<8x8x1xf32> -> vector<8x8x1xf32>
    %78 = vector.broadcast %77 : vector<8x8x1xf32> to vector<8x8x16xf32>
    %79 = arith.mulf %76, %78 : vector<8x8x16xf32>
    %80 = vector.extract_strided_slice %79 {offsets = [0, 0, 0], sizes = [1, 8, 16], strides = [1, 1, 1]} : vector<8x8x16xf32> to vector<1x8x16xf32>
    %81 = vector.shape_cast %80 : vector<1x8x16xf32> to vector<8x16xf32>
    %82 = vector.extract_strided_slice %79 {offsets = [1, 0, 0], sizes = [1, 8, 16], strides = [1, 1, 1]} : vector<8x8x16xf32> to vector<1x8x16xf32>
    %83 = vector.shape_cast %82 : vector<1x8x16xf32> to vector<8x16xf32>
    %84 = vector.extract_strided_slice %79 {offsets = [2, 0, 0], sizes = [1, 8, 16], strides = [1, 1, 1]} : vector<8x8x16xf32> to vector<1x8x16xf32>
    %85 = vector.shape_cast %84 : vector<1x8x16xf32> to vector<8x16xf32>
    %86 = vector.extract_strided_slice %79 {offsets = [3, 0, 0], sizes = [1, 8, 16], strides = [1, 1, 1]} : vector<8x8x16xf32> to vector<1x8x16xf32>
    %87 = vector.shape_cast %86 : vector<1x8x16xf32> to vector<8x16xf32>
    %88 = vector.extract_strided_slice %79 {offsets = [4, 0, 0], sizes = [1, 8, 16], strides = [1, 1, 1]} : vector<8x8x16xf32> to vector<1x8x16xf32>
    %89 = vector.shape_cast %88 : vector<1x8x16xf32> to vector<8x16xf32>
    %90 = vector.extract_strided_slice %79 {offsets = [5, 0, 0], sizes = [1, 8, 16], strides = [1, 1, 1]} : vector<8x8x16xf32> to vector<1x8x16xf32>
    %91 = vector.shape_cast %90 : vector<1x8x16xf32> to vector<8x16xf32>
    %92 = vector.extract_strided_slice %79 {offsets = [6, 0, 0], sizes = [1, 8, 16], strides = [1, 1, 1]} : vector<8x8x16xf32> to vector<1x8x16xf32>
    %93 = vector.shape_cast %92 : vector<1x8x16xf32> to vector<8x16xf32>
    %94 = vector.extract_strided_slice %79 {offsets = [7, 0, 0], sizes = [1, 8, 16], strides = [1, 1, 1]} : vector<8x8x16xf32> to vector<1x8x16xf32>
    %95 = vector.shape_cast %94 : vector<1x8x16xf32> to vector<8x16xf32>
    %96 = tpu.concatenate %81, %83, %85, %87, %89, %91, %93, %95 in 1 : vector<8x16xf32>, vector<8x16xf32>, vector<8x16xf32>, vector<8x16xf32>, vector<8x16xf32>, vector<8x16xf32>, vector<8x16xf32>, vector<8x16xf32> -> vector<8x128xf32>
    %97 = arith.truncf %96 : vector<8x128xf32> to vector<8x128xbf16>
    %c0_11 = arith.constant 0 : index
    %c0_12 = arith.constant 0 : index
    %98 = vector.load %arg4[%c0_11, %c0_12] : memref<128x128xbf16, #tpu.memory_space<vmem>>, vector<128x128xbf16>
    %cst_13 = arith.constant dense<0.000000e+00> : vector<8x128xf32>
    %99 = tpu.matmul %97, %98, %cst_13 {dimension_numbers = #tpu.dot_dimension_numbers<[1], [0], [0], [1], [0, 0, 1, 1], [], []>} : vector<8x128xbf16>, vector<128x128xbf16>, vector<8x128xf32> -> vector<8x128xf32>
    %c0_14 = arith.constant 0 : index
    %c0_15 = arith.constant 0 : index
    %100 = vector.load %arg5[%c0_14, %c0_15] : memref<1x128xf32, #tpu.memory_space<vmem>>, vector<1x128xf32>
    %101 = vector.broadcast %100 : vector<1x128xf32> to vector<8x128xf32>
    %102 = arith.addf %99, %101 : vector<8x128xf32>
    %103 = arith.addf %102, %1 : vector<8x128xf32>
    %c0_16 = arith.constant 0 : index
    %c0_17 = arith.constant 0 : index
    %104 = vector.load %arg6[%c0_16, %c0_17] : memref<1x128xf32, #tpu.memory_space<vmem>>, vector<1x128xf32>
    %c0_18 = arith.constant 0 : index
    %c0_19 = arith.constant 0 : index
    %105 = vector.load %arg7[%c0_18, %c0_19] : memref<1x128xf32, #tpu.memory_space<vmem>>, vector<1x128xf32>
    %cst_20 = arith.constant dense<0.000000e+00> : vector<8xf32>
    %106 = vector.multi_reduction <add>, %103, %cst_20 [1] : vector<8x128xf32> to vector<8xf32>
    %107 = vector.shape_cast %106 : vector<8xf32> to vector<8x1xf32>
    %cst_21 = arith.constant 1.280000e+02 : f32
    %108 = vector.broadcast %cst_21 : f32 to vector<8x1xf32>
    %109 = arith.divf %107, %108 : vector<8x1xf32>
    %110 = vector.broadcast %109 : vector<8x1xf32> to vector<8x128xf32>
    %111 = arith.subf %103, %110 : vector<8x128xf32>
    %112 = arith.mulf %111, %111 : vector<8x128xf32>
    %cst_22 = arith.constant dense<0.000000e+00> : vector<8xf32>
    %113 = vector.multi_reduction <add>, %112, %cst_22 [1] : vector<8x128xf32> to vector<8xf32>
    %114 = vector.shape_cast %113 : vector<8xf32> to vector<8x1xf32>
    %cst_23 = arith.constant 1.280000e+02 : f32
    %115 = vector.broadcast %cst_23 : f32 to vector<8x1xf32>
    %116 = arith.divf %114, %115 : vector<8x1xf32>
    %117 = vector.broadcast %109 : vector<8x1xf32> to vector<8x128xf32>
    %118 = arith.subf %103, %117 : vector<8x128xf32>
    %cst_24 = arith.constant 9.99999974E-6 : f32
    %119 = vector.broadcast %cst_24 : f32 to vector<8x1xf32>
    %120 = arith.addf %116, %119 : vector<8x1xf32>
    %121 = math.rsqrt %120 : vector<8x1xf32>
    %122 = vector.broadcast %121 : vector<8x1xf32> to vector<8x128xf32>
    %123 = arith.mulf %118, %122 : vector<8x128xf32>
    %124 = vector.broadcast %104 : vector<1x128xf32> to vector<8x128xf32>
    %125 = arith.mulf %123, %124 : vector<8x128xf32>
    %126 = vector.broadcast %105 : vector<1x128xf32> to vector<8x128xf32>
    %127 = arith.addf %125, %126 : vector<8x128xf32>
    %128 = arith.truncf %127 : vector<8x128xf32> to vector<8x128xbf16>
    %c0_25 = arith.constant 0 : index
    %c0_26 = arith.constant 0 : index
    %129 = vector.load %arg8[%c0_25, %c0_26] : memref<128x128xbf16, #tpu.memory_space<vmem>>, vector<128x128xbf16>
    %cst_27 = arith.constant dense<0.000000e+00> : vector<8x128xf32>
    %130 = tpu.matmul %128, %129, %cst_27 {dimension_numbers = #tpu.dot_dimension_numbers<[1], [0], [0], [1], [0, 0, 1, 1], [], []>} : vector<8x128xbf16>, vector<128x128xbf16>, vector<8x128xf32> -> vector<8x128xf32>
    %c0_28 = arith.constant 0 : index
    %c0_29 = arith.constant 0 : index
    %131 = vector.load %arg9[%c0_28, %c0_29] : memref<1x128xf32, #tpu.memory_space<vmem>>, vector<1x128xf32>
    %132 = vector.broadcast %131 : vector<1x128xf32> to vector<8x128xf32>
    %133 = arith.addf %130, %132 : vector<8x128xf32>
    %134 = arith.addf %133, %127 : vector<8x128xf32>
    %c0_30 = arith.constant 0 : index
    %c0_31 = arith.constant 0 : index
    %135 = vector.load %arg10[%c0_30, %c0_31] : memref<1x128xf32, #tpu.memory_space<vmem>>, vector<1x128xf32>
    %c0_32 = arith.constant 0 : index
    %c0_33 = arith.constant 0 : index
    %136 = vector.load %arg11[%c0_32, %c0_33] : memref<1x128xf32, #tpu.memory_space<vmem>>, vector<1x128xf32>
    %cst_34 = arith.constant dense<0.000000e+00> : vector<8xf32>
    %137 = vector.multi_reduction <add>, %134, %cst_34 [1] : vector<8x128xf32> to vector<8xf32>
    %138 = vector.shape_cast %137 : vector<8xf32> to vector<8x1xf32>
    %cst_35 = arith.constant 1.280000e+02 : f32
    %139 = vector.broadcast %cst_35 : f32 to vector<8x1xf32>
    %140 = arith.divf %138, %139 : vector<8x1xf32>
    %141 = vector.broadcast %140 : vector<8x1xf32> to vector<8x128xf32>
    %142 = arith.subf %134, %141 : vector<8x128xf32>
    %143 = arith.mulf %142, %142 : vector<8x128xf32>
    %cst_36 = arith.constant dense<0.000000e+00> : vector<8xf32>
    %144 = vector.multi_reduction <add>, %143, %cst_36 [1] : vector<8x128xf32> to vector<8xf32>
    %145 = vector.shape_cast %144 : vector<8xf32> to vector<8x1xf32>
    %cst_37 = arith.constant 1.280000e+02 : f32
    %146 = vector.broadcast %cst_37 : f32 to vector<8x1xf32>
    %147 = arith.divf %145, %146 : vector<8x1xf32>
    %148 = vector.broadcast %140 : vector<8x1xf32> to vector<8x128xf32>
    %149 = arith.subf %134, %148 : vector<8x128xf32>
    %cst_38 = arith.constant 9.99999974E-6 : f32
    %150 = vector.broadcast %cst_38 : f32 to vector<8x1xf32>
    %151 = arith.addf %147, %150 : vector<8x1xf32>
    %152 = math.rsqrt %151 : vector<8x1xf32>
    %153 = vector.broadcast %152 : vector<8x1xf32> to vector<8x128xf32>
    %154 = arith.mulf %149, %153 : vector<8x128xf32>
    %155 = vector.broadcast %135 : vector<1x128xf32> to vector<8x128xf32>
    %156 = arith.mulf %154, %155 : vector<8x128xf32>
    %157 = vector.broadcast %136 : vector<1x128xf32> to vector<8x128xf32>
    %158 = arith.addf %156, %157 : vector<8x128xf32>
    %c0_39 = arith.constant 0 : index
    %c0_40 = arith.constant 0 : index
    %c0_41 = arith.constant 0 : index
    %159 = vector.load %arg12[%c0_39, %c0_40, %c0_41] : memref<1x8x128xf32, #tpu.memory_space<vmem>>, vector<1x8x128xf32>
    %160 = vector.shape_cast %159 : vector<1x8x128xf32> to vector<8x128xf32>
    %161 = vector.shape_cast %158 : vector<8x128xf32> to vector<1x8x128xf32>
    tpu.vector_store %arg12[%c0_39, %c0_40, %c0_41], %161 {strides = array<i32>} : memref<1x8x128xf32, #tpu.memory_space<vmem>>, vector<1x8x128xf32>,
    return
  }
  func.func @transform_0(%arg0: i32) -> (i32, i32, i32) {
    %c0_i32 = arith.constant 0 : i32
    %c0_i32_0 = arith.constant 0 : i32
    %c0_i32_1 = arith.constant 0 : i32
    return %arg0, %c0_i32, %c0_i32_0 : i32, i32, i32
  }
  func.func @transform_1(%arg0: i32) -> (i32, i32) {
    %c0_i32 = arith.constant 0 : i32
    %c0_i32_0 = arith.constant 0 : i32
    %c0_i32_1 = arith.constant 0 : i32
    return %c0_i32, %c0_i32_0 : i32, i32
  }
  func.func @transform_2(%arg0: i32) -> (i32, i32) {
    %c0_i32 = arith.constant 0 : i32
    %c0_i32_0 = arith.constant 0 : i32
    %c0_i32_1 = arith.constant 0 : i32
    return %c0_i32, %c0_i32_0 : i32, i32
  }
  func.func @transform_3(%arg0: i32) -> (i32, i32) {
    %c0_i32 = arith.constant 0 : i32
    %c0_i32_0 = arith.constant 0 : i32
    %c0_i32_1 = arith.constant 0 : i32
    return %c0_i32, %c0_i32_0 : i32, i32
  }
  func.func @transform_4(%arg0: i32) -> (i32, i32) {
    %c0_i32 = arith.constant 0 : i32
    %c0_i32_0 = arith.constant 0 : i32
    %c0_i32_1 = arith.constant 0 : i32
    return %c0_i32, %c0_i32_0 : i32, i32
  }
  func.func @transform_5(%arg0: i32) -> (i32, i32) {
    %c0_i32 = arith.constant 0 : i32
    %c0_i32_0 = arith.constant 0 : i32
    %c0_i32_1 = arith.constant 0 : i32
    return %c0_i32, %c0_i32_0 : i32, i32
  }
  func.func @transform_6(%arg0: i32) -> (i32, i32) {
    %c0_i32 = arith.constant 0 : i32
    %c0_i32_0 = arith.constant 0 : i32
    %c0_i32_1 = arith.constant 0 : i32
    return %c0_i32, %c0_i32_0 : i32, i32
  }
  func.func @transform_7(%arg0: i32) -> (i32, i32) {
    %c0_i32 = arith.constant 0 : i32
    %c0_i32_0 = arith.constant 0 : i32
    %c0_i32_1 = arith.constant 0 : i32
    return %c0_i32, %c0_i32_0 : i32, i32
  }
  func.func @transform_8(%arg0: i32) -> (i32, i32) {
    %c0_i32 = arith.constant 0 : i32
    %c0_i32_0 = arith.constant 0 : i32
    %c0_i32_1 = arith.constant 0 : i32
    return %c0_i32, %c0_i32_0 : i32, i32
  }
  func.func @transform_9(%arg0: i32) -> (i32, i32) {
    %c0_i32 = arith.constant 0 : i32
    %c0_i32_0 = arith.constant 0 : i32
    %c0_i32_1 = arith.constant 0 : i32
    return %c0_i32, %c0_i32_0 : i32, i32
  }
  func.func @transform_10(%arg0: i32) -> (i32, i32) {
    %c0_i32 = arith.constant 0 : i32
    %c0_i32_0 = arith.constant 0 : i32
    %c0_i32_1 = arith.constant 0 : i32
    return %c0_i32, %c0_i32_0 : i32, i32
  }
  func.func @transform_11(%arg0: i32) -> (i32, i32, i32) {
    %c0_i32 = arith.constant 0 : i32
    %c0_i32_0 = arith.constant 0 : i32
    %c0_i32_1 = arith.constant 0 : i32
    return %arg0, %c0_i32, %c0_i32_0 : i32, i32, i32
  }
}

</mosaic_0001>

<llo_original>
// kernel: transformer_layer.1
$region0: #{transformer_layer.1}
  #allocation0 [shape = 'u32[]', space=smem, size = 0x4, offset = 0x4, fixed_abs, tag = 'smem constant byte address 0x4 - core index']
  #allocation1 [shape = 'u32[144,128]{1,0:T(1,128)}', space=vmem, size = 0x12000, scoped, tag = 'internal scratch']
  %s0 = inlined_call_operand.vmem [shape: f32[4,8,128], index: 0, kind: input, shape index: {}]
  %s1 = inlined_call_operand.vmem [shape: bf16[128,384], index: 1, kind: input, shape index: {}]
  %s2 = inlined_call_operand.vmem [shape: f32[1,384], index: 2, kind: input, shape index: {}]
  %s3 = inlined_call_operand.vmem [shape: bf16[128,128], index: 3, kind: input, shape index: {}]
  %s4 = inlined_call_operand.vmem [shape: f32[1,128], index: 4, kind: input, shape index: {}]
  %s5 = inlined_call_operand.vmem [shape: f32[1,128], index: 5, kind: input, shape index: {}]
  %s6 = inlined_call_operand.vmem [shape: f32[1,128], index: 6, kind: input, shape index: {}]
  %s7 = inlined_call_operand.vmem [shape: bf16[128,128], index: 7, kind: input, shape index: {}]
  %s8 = inlined_call_operand.vmem [shape: f32[1,128], index: 8, kind: input, shape index: {}]
  %s9 = inlined_call_operand.vmem [shape: f32[1,128], index: 9, kind: input, shape index: {}]
  %s10 = inlined_call_operand.vmem [shape: f32[1,128], index: 10, kind: input, shape index: {}]
  %s11 = inlined_call_operand.hbm [shape: f32[4,8,128], index: 11, kind: output, shape index: {}]
  %s12 = sld [smem:[#allocation0]]
  $region77: #{transformer_layer.1} parent=0
    _
  %s14 = ssub.s32 1, %s12
  %s15 = scalar_select 0, %s14, %s12
  $region1: #{transformer_layer.1} parent=0
    #allocation2 [shape = 'u8[8192]{0}', space=vmem, size = 0x2000, scoped, tag = 'output window, operand 0']
    #allocation3 [shape = 's32[2]{0}', space=sflag, size = 0x8, scoped, tag = 'scoped memory for transformer_layer.1']
    %16 = vsyncpa [#allocation3], 0
    %s17 = scalar_lea.sflag [#allocation3], 1
    %18 = vsyncpa %s17, 0
    loop: start=0, step=1, limit=6
    $region2: #{transformer_layer.1} parent=1 // loop_pre_header
      _
    $region3: #{transformer_layer.1} parent=1 // loop_header
      %s20 = sphi 0, %s24
      %p21 = scmp.ge.s32.totalorder %s20, 6
      %s30 = sphi 0, %s32
      %s33 = sphi 0, %s30
      %s34 = sphi 0, %s33
      %s50 = sphi 0, %s34
      %s54 = sphi 0, %s54
      %s56 = sphi 0, %s54
      %s57 = sphi 0, %s56
      %s71 = sphi 0, %s57
      %s75 = sphi 0, %s75
      %s77 = sphi 0, %s75
      %s78 = sphi 0, %s77
      %s92 = sphi 0, %s78
      %s96 = sphi 0, %s96
      %s98 = sphi 0, %s96
      %s99 = sphi 0, %s98
      %s113 = sphi 0, %s99
      %s117 = sphi 0, %s117
      %s119 = sphi 0, %s117
      %s120 = sphi 0, %s119
      %s134 = sphi 0, %s120
      %s138 = sphi 0, %s138
      %s140 = sphi 0, %s138
      %s141 = sphi 0, %s140
      %s155 = sphi 0, %s141
      %s159 = sphi 0, %s159
      %s161 = sphi 0, %s159
      %s162 = sphi 0, %s161
      %s176 = sphi 0, %s162
      %s180 = sphi 0, %s180
      %s182 = sphi 0, %s180
      %s183 = sphi 0, %s182
      %s197 = sphi 0, %s183
      %s201 = sphi 0, %s201
      %s203 = sphi 0, %s201
      %s204 = sphi 0, %s203
      %s218 = sphi 0, %s204
      %s222 = sphi 0, %s222
      %s224 = sphi 0, %s222
      %s225 = sphi 0, %s224
      %s239 = sphi 0, %s225
      %s243 = sphi 0, %s243
      %s245 = sphi 0, %s243
      %s246 = sphi 0, %s245
      %s260 = sphi 0, %s246
      %s266 = sphi 0, %s268
      %s269 = sphi 0, %s266
      %s270 = sphi 0, %s269
      %s286 = sphi 0, %s270
    $region4: #{transformer_layer.1} parent=1 // loop_header_branch
      %23 = sbr.rel (%p21) target = $region8
    $region5: #{transformer_layer.1} parent=1 // loop_body
      %s25 = ssub.s32 %s20, 1
      %s26 = ssub.s32 %s20, 2
      %s27 = sadd.s32 %s20, 1
      %s28 = ssub.s32 %s20, %s27
      %p29 = scmp.eq.s32.totalorder %s28, 0
      %s31 = sadd.s32 %s30, 1
      %s32 = scalar_select %p29, %s30, %s31
      %p35 = pneg %p29
      %p36 = scmp.eq.s32.totalorder %s20, 3
      %p37 = por %p35, %p36
      %p38 = scmp.ne.s32.totalorder %s30, %s33
      %p39 = scmp.eq.s32.totalorder %s20, 0
      %p40 = por %p38, %p39
      %p41 = scmp.ne.s32.totalorder %s30, %s33
      %p42 = scmp.eq.s32.totalorder %s25, 3
      %p43 = por %p41, %p42
      %p44 = scmp.ne.s32.totalorder %s33, %s34
      %p45 = scmp.eq.s32.totalorder %s25, 0
      %p46 = por %p44, %p45
      %p47 = scmp.ne.s32.totalorder %s33, %s34
      %p48 = scmp.eq.s32.totalorder %s26, 3
      %p49 = por %p47, %p48
      %p51 = scmp.ne.s32.totalorder %s34, %s50
      %p52 = scmp.eq.s32.totalorder %s26, 0
      %p53 = por %p51, %p52
      %s55 = sadd.s32 %s54, 1
      %p58 = scmp.eq.s32.totalorder %s20, 3
      %p59 = scmp.ne.s32.totalorder %s54, %s56
      %p60 = scmp.eq.s32.totalorder %s20, 0
      %p61 = por %p59, %p60
      %p62 = scmp.ne.s32.totalorder %s54, %s56
      %p63 = scmp.eq.s32.totalorder %s25, 3
      %p64 = por %p62, %p63
      %p65 = scmp.ne.s32.totalorder %s56, %s57
      %p66 = scmp.eq.s32.totalorder %s25, 0
      %p67 = por %p65, %p66
      %p68 = scmp.ne.s32.totalorder %s56, %s57
      %p69 = scmp.eq.s32.totalorder %s26, 3
      %p70 = por %p68, %p69
      %p72 = scmp.ne.s32.totalorder %s57, %s71
      %p73 = scmp.eq.s32.totalorder %s26, 0
      %p74 = por %p72, %p73
      %s76 = sadd.s32 %s75, 1
      %p79 = scmp.eq.s32.totalorder %s20, 3
      %p80 = scmp.ne.s32.totalorder %s75, %s77
      %p81 = scmp.eq.s32.totalorder %s20, 0
      %p82 = por %p80, %p81
      %p83 = scmp.ne.s32.totalorder %s75, %s77
      %p84 = scmp.eq.s32.totalorder %s25, 3
      %p85 = por %p83, %p84
      %p86 = scmp.ne.s32.totalorder %s77, %s78
      %p87 = scmp.eq.s32.totalorder %s25, 0
      %p88 = por %p86, %p87
      %p89 = scmp.ne.s32.totalorder %s77, %s78
      %p90 = scmp.eq.s32.totalorder %s26, 3
      %p91 = por %p89, %p90
      %p93 = scmp.ne.s32.totalorder %s78, %s92
      %p94 = scmp.eq.s32.totalorder %s26, 0
      %p95 = por %p93, %p94
      %s97 = sadd.s32 %s96, 1
      %p100 = scmp.eq.s32.totalorder %s20, 3
      %p101 = scmp.ne.s32.totalorder %s96, %s98
      %p102 = scmp.eq.s32.totalorder %s20, 0
      %p103 = por %p101, %p102
      %p104 = scmp.ne.s32.totalorder %s96, %s98
      %p105 = scmp.eq.s32.totalorder %s25, 3
      %p106 = por %p104, %p105
      %p107 = scmp.ne.s32.totalorder %s98, %s99
      %p108 = scmp.eq.s32.totalorder %s25, 0
      %p109 = por %p107, %p108
      %p110 = scmp.ne.s32.totalorder %s98, %s99
      %p111 = scmp.eq.s32.totalorder %s26, 3
      %p112 = por %p110, %p111
      %p114 = scmp.ne.s32.totalorder %s99, %s113
      %p115 = scmp.eq.s32.totalorder %s26, 0
      %p116 = por %p114, %p115
      %s118 = sadd.s32 %s117, 1
      %p121 = scmp.eq.s32.totalorder %s20, 3
      %p122 = scmp.ne.s32.totalorder %s117, %s119
      %p123 = scmp.eq.s32.totalorder %s20, 0
      %p124 = por %p122, %p123
      %p125 = scmp.ne.s32.totalorder %s117, %s119
      %p126 = scmp.eq.s32.totalorder %s25, 3
      %p127 = por %p125, %p126
      %p128 = scmp.ne.s32.totalorder %s119, %s120
      %p129 = scmp.eq.s32.totalorder %s25, 0
      %p130 = por %p128, %p129
      %p131 = scmp.ne.s32.totalorder %s119, %s120
      %p132 = scmp.eq.s32.totalorder %s26, 3
      %p133 = por %p131, %p132
      %p135 = scmp.ne.s32.totalorder %s120, %s134
      %p136 = scmp.eq.s32.totalorder %s26, 0
      %p137 = por %p135, %p136
      %s139 = sadd.s32 %s138, 1
      %p142 = scmp.eq.s32.totalorder %s20, 3
      %p143 = scmp.ne.s32.totalorder %s138, %s140
      %p144 = scmp.eq.s32.totalorder %s20, 0
      %p145 = por %p143, %p144
      %p146 = scmp.ne.s32.totalorder %s138, %s140
      %p147 = scmp.eq.s32.totalorder %s25, 3
      %p148 = por %p146, %p147
      %p149 = scmp.ne.s32.totalorder %s140, %s141
      %p150 = scmp.eq.s32.totalorder %s25, 0
      %p151 = por %p149, %p150
      %p152 = scmp.ne.s32.totalorder %s140, %s141
      %p153 = scmp.eq.s32.totalorder %s26, 3
      %p154 = por %p152, %p153
      %p156 = scmp.ne.s32.totalorder %s141, %s155
      %p157 = scmp.eq.s32.totalorder %s26, 0
      %p158 = por %p156, %p157
      %s160 = sadd.s32 %s159, 1
      %p163 = scmp.eq.s32.totalorder %s20, 3
      %p164 = scmp.ne.s32.totalorder %s159, %s161
      %p165 = scmp.eq.s32.totalorder %s20, 0
      %p166 = por %p164, %p165
      %p167 = scmp.ne.s32.totalorder %s159, %s161
      %p168 = scmp.eq.s32.totalorder %s25, 3
      %p169 = por %p167, %p168
      %p170 = scmp.ne.s32.totalorder %s161, %s162
      %p171 = scmp.eq.s32.totalorder %s25, 0
      %p172 = por %p170, %p171
      %p173 = scmp.ne.s32.totalorder %s161, %s162
      %p174 = scmp.eq.s32.totalorder %s26, 3
      %p175 = por %p173, %p174
      %p177 = scmp.ne.s32.totalorder %s162, %s176
      %p178 = scmp.eq.s32.totalorder %s26, 0
      %p179 = por %p177, %p178
      %s181 = sadd.s32 %s180, 1
      %p184 = scmp.eq.s32.totalorder %s20, 3
      %p185 = scmp.ne.s32.totalorder %s180, %s182
      %p186 = scmp.eq.s32.totalorder %s20, 0
      %p187 = por %p185, %p186
      %p188 = scmp.ne.s32.totalorder %s180, %s182
      %p189 = scmp.eq.s32.totalorder %s25, 3
      %p190 = por %p188, %p189
      %p191 = scmp.ne.s32.totalorder %s182, %s183
      %p192 = scmp.eq.s32.totalorder %s25, 0
      %p193 = por %p191, %p192
      %p194 = scmp.ne.s32.totalorder %s182, %s183
      %p195 = scmp.eq.s32.totalorder %s26, 3
      %p196 = por %p194, %p195
      %p198 = scmp.ne.s32.totalorder %s183, %s197
      %p199 = scmp.eq.s32.totalorder %s26, 0
      %p200 = por %p198, %p199
      %s202 = sadd.s32 %s201, 1
      %p205 = scmp.eq.s32.totalorder %s20, 3
      %p206 = scmp.ne.s32.totalorder %s201, %s203
      %p207 = scmp.eq.s32.totalorder %s20, 0
      %p208 = por %p206, %p207
      %p209 = scmp.ne.s32.totalorder %s201, %s203
      %p210 = scmp.eq.s32.totalorder %s25, 3
      %p211 = por %p209, %p210
      %p212 = scmp.ne.s32.totalorder %s203, %s204
      %p213 = scmp.eq.s32.totalorder %s25, 0
      %p214 = por %p212, %p213
      %p215 = scmp.ne.s32.totalorder %s203, %s204
      %p216 = scmp.eq.s32.totalorder %s26, 3
      %p217 = por %p215, %p216
      %p219 = scmp.ne.s32.totalorder %s204, %s218
      %p220 = scmp.eq.s32.totalorder %s26, 0
      %p221 = por %p219, %p220
      %s223 = sadd.s32 %s222, 1
      %p226 = scmp.eq.s32.totalorder %s20, 3
      %p227 = scmp.ne.s32.totalorder %s222, %s224
      %p228 = scmp.eq.s32.totalorder %s20, 0
      %p229 = por %p227, %p228
      %p230 = scmp.ne.s32.totalorder %s222, %s224
      %p231 = scmp.eq.s32.totalorder %s25, 3
      %p232 = por %p230, %p231
      %p233 = scmp.ne.s32.totalorder %s224, %s225
      %p234 = scmp.eq.s32.totalorder %s25, 0
      %p235 = por %p233, %p234
      %p236 = scmp.ne.s32.totalorder %s224, %s225
      %p237 = scmp.eq.s32.totalorder %s26, 3
      %p238 = por %p236, %p237
      %p240 = scmp.ne.s32.totalorder %s225, %s239
      %p241 = scmp.eq.s32.totalorder %s26, 0
      %p242 = por %p240, %p241
      %s244 = sadd.s32 %s243, 1
      %p247 = scmp.eq.s32.totalorder %s20, 3
      %p248 = scmp.ne.s32.totalorder %s243, %s245
      %p249 = scmp.eq.s32.totalorder %s20, 0
      %p250 = por %p248, %p249
      %p251 = scmp.ne.s32.totalorder %s243, %s245
      %p252 = scmp.eq.s32.totalorder %s25, 3
      %p253 = por %p251, %p252
      %p254 = scmp.ne.s32.totalorder %s245, %s246
      %p255 = scmp.eq.s32.totalorder %s25, 0
      %p256 = por %p254, %p255
      %p257 = scmp.ne.s32.totalorder %s245, %s246
      %p258 = scmp.eq.s32.totalorder %s26, 3
      %p259 = por %p257, %p258
      %p261 = scmp.ne.s32.totalorder %s246, %s260
      %p262 = scmp.eq.s32.totalorder %s26, 0
      %p263 = por %p261, %p262
      %s264 = ssub.s32 %s20, %s27
      %p265 = scmp.eq.s32.totalorder %s264, 0
      %s267 = sadd.s32 %s266, 1
      %s268 = scalar_select %p265, %s266, %s267
      %p271 = pneg %p265
      %p272 = scmp.eq.s32.totalorder %s20, 3
      %p273 = por %p271, %p272
      %p274 = scmp.ne.s32.totalorder %s266, %s269
      %p275 = scmp.eq.s32.totalorder %s20, 0
      %p276 = por %p274, %p275
      %p277 = scmp.ne.s32.totalorder %s266, %s269
      %p278 = scmp.eq.s32.totalorder %s25, 3
      %p279 = por %p277, %p278
      %p280 = scmp.ne.s32.totalorder %s269, %s270
      %p281 = scmp.eq.s32.totalorder %s25, 0
      %p282 = por %p280, %p281
      %p283 = scmp.ne.s32.totalorder %s269, %s270
      %p284 = scmp.eq.s32.totalorder %s26, 3
      %p285 = por %p283, %p284
      %p287 = scmp.ne.s32.totalorder %s270, %s286
      %p288 = scmp.eq.s32.totalorder %s26, 0
      %p289 = por %p287, %p288
      %p290 = scmp.le.s32.totalorder 1, %s20
      %p291 = scmp.lt.s32.totalorder %s20, 5
      %p292 = pnand %p290, %p291
      %p293 = pneg %p292
      // Predicated region
      $region9: #{transformer_layer.1} parent=5 // pred_check
        _
      $region10: #{transformer_layer.1} parent=5 // pred_check_branch
        %295 = sbr.rel (%p292) target = $region12
      $region11: #{transformer_layer.1} parent=5 // pred_region
        %s296 = ssub.s32 %s20, 1
        // Predicated region
        $region13: #{transformer_layer.1} parent=11 // pred_check
          %p297 = pneg %p67
        $region14: #{transformer_layer.1} parent=11 // pred_check_branch
          %299 = sbr.rel (%p297) target = $region16
        $region15: #{transformer_layer.1} parent=11 // pred_region
          _
        $region16: #{transformer_layer.1} parent=11 // pred_fallthru
          _
        // Predicated region
        $region17: #{transformer_layer.1} parent=11 // pred_check
          %p300 = pneg %p88
        $region18: #{transformer_layer.1} parent=11 // pred_check_branch
          %302 = sbr.rel (%p300) target = $region20
        $region19: #{transformer_layer.1} parent=11 // pred_region
          _
        $region20: #{transformer_layer.1} parent=11 // pred_fallthru
          _
        // Predicated region
        $region21: #{transformer_layer.1} parent=11 // pred_check
          %p303 = pneg %p109
        $region22: #{transformer_layer.1} parent=11 // pred_check_branch
          %305 = sbr.rel (%p303) target = $region24
        $region23: #{transformer_layer.1} parent=11 // pred_region
          _
        $region24: #{transformer_layer.1} parent=11 // pred_fallthru
          _
        // Predicated region
        $region25: #{transformer_layer.1} parent=11 // pred_check
          %p306 = pneg %p130
        $region26: #{transformer_layer.1} parent=11 // pred_check_branch
          %308 = sbr.rel (%p306) target = $region28
        $region27: #{transformer_layer.1} parent=11 // pred_region
          _
        $region28: #{transformer_layer.1} parent=11 // pred_fallthru
          _
        // Predicated region
        $region29: #{transformer_layer.1} parent=11 // pred_check
          %p309 = pneg %p151
        $region30: #{transformer_layer.1} parent=11 // pred_check_branch
          %311 = sbr.rel (%p309) target = $region32
        $region31: #{transformer_layer.1} parent=11 // pred_region
          _
        $region32: #{transformer_layer.1} parent=11 // pred_fallthru
          _
        // Predicated region
        $region33: #{transformer_layer.1} parent=11 // pred_check
          %p312 = pneg %p172
        $region34: #{transformer_layer.1} parent=11 // pred_check_branch
          %314 = sbr.rel (%p312) target = $region36
        $region35: #{transformer_layer.1} parent=11 // pred_region
          _
        $region36: #{transformer_layer.1} parent=11 // pred_fallthru
          _
        // Predicated region
        $region37: #{transformer_layer.1} parent=11 // pred_check
          %p315 = pneg %p193
        $region38: #{transformer_layer.1} parent=11 // pred_check_branch
          %317 = sbr.rel (%p315) target = $region40
        $region39: #{transformer_layer.1} parent=11 // pred_region
          _
        $region40: #{transformer_layer.1} parent=11 // pred_fallthru
          _
        // Predicated region
        $region41: #{transformer_layer.1} parent=11 // pred_check
          %p318 = pneg %p214
        $region42: #{transformer_layer.1} parent=11 // pred_check_branch
          %320 = sbr.rel (%p318) target = $region44
        $region43: #{transformer_layer.1} parent=11 // pred_region
          _
        $region44: #{transformer_layer.1} parent=11 // pred_fallthru
          _
        // Predicated region
        $region45: #{transformer_layer.1} parent=11 // pred_check
          %p321 = pneg %p235
        $region46: #{transformer_layer.1} parent=11 // pred_check_branch
          %323 = sbr.rel (%p321) target = $region48
        $region47: #{transformer_layer.1} parent=11 // pred_region
          _
        $region48: #{transformer_layer.1} parent=11 // pred_fallthru
          _
        // Predicated region
        $region49: #{transformer_layer.1} parent=11 // pred_check
          %p324 = pneg %p256
        $region50: #{transformer_layer.1} parent=11 // pred_check_branch
          %326 = sbr.rel (%p324) target = $region52
        $region51: #{transformer_layer.1} parent=11 // pred_region
          _
        $region52: #{transformer_layer.1} parent=11 // pred_fallthru
          _
      $region12: #{transformer_layer.1} parent=5 // pred_fallthru
        _
      %p327 = scmp.lt.s32.totalorder %s20, 4
      // Predicated region
      $region53: #{transformer_layer.1} parent=5 // pred_check
        %p328 = pneg %p327
      $region54: #{transformer_layer.1} parent=5 // pred_check_branch
        %330 = sbr.rel (%p328) target = $region56
      $region55: #{transformer_layer.1} parent=5 // pred_region
        // Predicated region
        $region57: #{transformer_layer.1} parent=55 // pred_check
          %p331 = pneg %p40
        $region58: #{transformer_layer.1} parent=55 // pred_check_branch
          %333 = sbr.rel (%p331) target = $region60
        $region59: #{transformer_layer.1} parent=55 // pred_region
          %p334 = scmp.lt.s32.totalorder %s20, 3
          %s335 = scalar_select %p334, %s20, 3
          %s336 = smul.addr %s335, 8
          %s337 = scalar_lea.vmem %s0, %s336
        $region60: #{transformer_layer.1} parent=55 // pred_fallthru
          _
      $region56: #{transformer_layer.1} parent=5 // pred_fallthru
        _
      %p338 = scmp.le.s32.totalorder 1, %s20
      %p339 = scmp.lt.s32.totalorder %s20, 5
      %p340 = pnand %p338, %p339
      %p341 = pneg %p340
      // Predicated region
      $region61: #{transformer_layer.1} parent=5 // pred_check
        _
      $region62: #{transformer_layer.1} parent=5 // pred_check_branch
        %343 = sbr.rel (%p340) target = $region64
      $region63: #{transformer_layer.1} parent=5 // pred_region
        %s344 = ssub.s32 %s20, 1
        %p345 = scmp.lt.s32.totalorder %s25, 3
        %s346 = scalar_select %p345, %s25, 3
        %s347 = smul.addr %s346, 8
        %s348 = scalar_lea.vmem %s0, %s347
        %p349 = pneg %p46
        %p350 = pneg %p43
        %p351 = pneg %p67
        %p352 = pneg %p64
        %p353 = pneg %p88
        %p354 = pneg %p85
        %p355 = pneg %p109
        %p356 = pneg %p106
        %p357 = pneg %p130
        %p358 = pneg %p127
        %p359 = pneg %p151
        %p360 = pneg %p148
        %p361 = pneg %p172
        %p362 = pneg %p169
        %p363 = pneg %p193
        %p364 = pneg %p190
        %p365 = pneg %p214
        %p366 = pneg %p211
        %p367 = pneg %p235
        %p368 = pneg %p232
        %p369 = pneg %p256
        %p370 = pneg %p253
        %p371 = pneg %p282
        %p372 = pneg %p279
        %s373 = sand.u32 %s269, 1
        %s374 = scalar_lea.sflag [#allocation3], %s373
        %s375 = sand.u32 %s269, 1
        %s376 = smul.addr %s375, 8
        %s377 = scalar_lea.vmem [#allocation2], %s376
        %p378 = scmp.lt.s32.totalorder %s25, 3
        %s379 = scalar_select %p378, %s25, 3
        %s380 = smul.addr %s379, 8
        %s381 = scalar_lea.vmem %s0, %s380
        %v383 = vld [vmem:[%s381] sm:$0xff]
        %v384 = vpack.c.bf16 %v383, %v383
        %v385 = vld [vmem:[%s1] sm:$0xff]
        %v386 = vld [vmem:[%s1 + $0x8] sm:$0xf]
        %v387 = vld [vmem:[%s1 + $0xc] sm:$0xff]
        %v388 = vld [vmem:[%s1 + $0x14] sm:$0xf]
        %v389 = vld [vmem:[%s1 + $0x18] sm:$0xff]
        %v390 = vld [vmem:[%s1 + $0x20] sm:$0xf]
        %v391 = vld [vmem:[%s1 + $0x24] sm:$0xff]
        %v392 = vld [vmem:[%s1 + $0x2c] sm:$0xf]
        %v393 = vld [vmem:[%s1 + $0x30] sm:$0xff]
        %v394 = vld [vmem:[%s1 + $0x38] sm:$0xf]
        %v395 = vld [vmem:[%s1 + $0x3c] sm:$0xff]
        %v396 = vld [vmem:[%s1 + $0x44] sm:$0xf]
        %v397 = vld [vmem:[%s1 + $0x48] sm:$0xff]
        %v398 = vld [vmem:[%s1 + $0x50] sm:$0xf]
        %v399 = vld [vmem:[%s1 + $0x54] sm:$0xff]
        %v400 = vld [vmem:[%s1 + $0x5c] sm:$0xf]
        %v401 = vld [vmem:[%s1 + $0x60] sm:$0xff]
        %v402 = vld [vmem:[%s1 + $0x68] sm:$0xf]
        %v403 = vld [vmem:[%s1 + $0x6c] sm:$0xff]
        %v404 = vld [vmem:[%s1 + $0x74] sm:$0xf]
        %v405 = vld [vmem:[%s1 + $0x78] sm:$0xff]
        %v406 = vld [vmem:[%s1 + $0x80] sm:$0xf]
        %v407 = vld [vmem:[%s1 + $0x84] sm:$0xff]
        %v408 = vld [vmem:[%s1 + $0x8c] sm:$0xf]
        %v409 = vld [vmem:[%s1 + $0x90] sm:$0xff]
        %v410 = vld [vmem:[%s1 + $0x98] sm:$0xf]
        %v411 = vld [vmem:[%s1 + $0x9c] sm:$0xff]
        %v412 = vld [vmem:[%s1 + $0xa4] sm:$0xf]
        %v413 = vld [vmem:[%s1 + $0xa8] sm:$0xff]
        %v414 = vld [vmem:[%s1 + $0xb0] sm:$0xf]
        %v415 = vld [vmem:[%s1 + $0xb4] sm:$0xff]
        %v416 = vld [vmem:[%s1 + $0xbc] sm:$0xf]
        %v417 = vld [vmem:[%s2] sm:$0x7]
        %v419 = vlaneseq
        %v420 = vshrl.u32 %v419, 7
        %v421 = vsub.s32 0, %v420
        %v422 = vrot.slane %v417, %v421
        %v423 = vlaneseq
        %v424 = vshrl.u32 %v423, 7
        %v425 = vsub.s32 1, %v424
        %v426 = vrot.slane %v417, %v425
        %v427 = vlaneseq
        %v428 = vshrl.u32 %v427, 7
        %v429 = vsub.s32 2, %v428
        %v430 = vrot.slane %v417, %v429
        %v466 = vunpack.c.l.b16 %v385
        %v467 = vunpack.c.h.b16 %v385
        %v468 = vunpack.c.l.b16 %v386
        %v469 = vunpack.c.l.b16 %v387
        %v470 = vunpack.c.h.b16 %v387
        %v471 = vunpack.c.l.b16 %v388
        %v472 = vunpack.c.l.b16 %v389
        %v473 = vunpack.c.h.b16 %v389
        %v474 = vunpack.c.l.b16 %v390
        %v475 = vunpack.c.l.b16 %v391
        %v476 = vunpack.c.h.b16 %v391
        %v477 = vunpack.c.l.b16 %v392
        %v478 = vunpack.c.l.b16 %v393
        %v479 = vunpack.c.h.b16 %v393
        %v480 = vunpack.c.l.b16 %v394
        %v481 = vunpack.c.l.b16 %v395
        %v482 = vunpack.c.h.b16 %v395
        %v483 = vunpack.c.l.b16 %v396
        %v484 = vunpack.c.l.b16 %v397
        %v485 = vunpack.c.h.b16 %v397
        %v486 = vunpack.c.l.b16 %v398
        %v487 = vunpack.c.l.b16 %v399
        %v488 = vunpack.c.h.b16 %v399
        %v489 = vunpack.c.l.b16 %v400
        %v490 = vunpack.c.l.b16 %v401
        %v491 = vunpack.c.h.b16 %v401
        %v492 = vunpack.c.l.b16 %v402
        %v493 = vunpack.c.l.b16 %v403
        %v494 = vunpack.c.h.b16 %v403
        %v495 = vunpack.c.l.b16 %v404
        %v496 = vunpack.c.l.b16 %v405
        %v497 = vunpack.c.h.b16 %v405
        %v498 = vunpack.c.l.b16 %v406
        %v499 = vunpack.c.l.b16 %v407
        %v500 = vunpack.c.h.b16 %v407
        %v501 = vunpack.c.l.b16 %v408
        %v502 = vunpack.c.l.b16 %v409
        %v503 = vunpack.c.h.b16 %v409
        %v504 = vunpack.c.l.b16 %v410
        %v505 = vunpack.c.l.b16 %v411
        %v506 = vunpack.c.h.b16 %v411
        %v507 = vunpack.c.l.b16 %v412
        %v508 = vunpack.c.l.b16 %v413
        %v509 = vunpack.c.h.b16 %v413
        %v510 = vunpack.c.l.b16 %v414
        %v511 = vunpack.c.l.b16 %v415
        %v512 = vunpack.c.h.b16 %v415
        %v513 = vunpack.c.l.b16 %v416
        %v514 = vpack.c.b16 %v469, %v466
        %v515 = vpack.c.b16 %v470, %v467
        %v516 = vpack.c.b16 %v471, %v468
        %v517 = vpack.c.b16 %v475, %v472
        %v518 = vpack.c.b16 %v476, %v473
        %v519 = vpack.c.b16 %v477, %v474
        %v520 = vpack.c.b16 %v481, %v478
        %v521 = vpack.c.b16 %v482, %v479
        %v522 = vpack.c.b16 %v483, %v480
        %v523 = vpack.c.b16 %v487, %v484
        %v524 = vpack.c.b16 %v488, %v485
        %v525 = vpack.c.b16 %v489, %v486
        %v526 = vpack.c.b16 %v493, %v490
        %v527 = vpack.c.b16 %v494, %v491
        %v528 = vpack.c.b16 %v495, %v492
        %v529 = vpack.c.b16 %v499, %v496
        %v530 = vpack.c.b16 %v500, %v497
        %v531 = vpack.c.b16 %v501, %v498
        %v532 = vpack.c.b16 %v505, %v502
        %v533 = vpack.c.b16 %v506, %v503
        %v534 = vpack.c.b16 %v507, %v504
        %v535 = vpack.c.b16 %v511, %v508
        %v536 = vpack.c.b16 %v512, %v509
        %v537 = vpack.c.b16 %v513, %v510
        %562 = vmatprep.subr.bf16.mxu0 %v536
        %563 = vmatpush1.bf16.msra.mxu0 %v535
        %564 = vmatprep.subr.bf16.mxu0 %v533
        %565 = vmatpush1.bf16.msra.mxu0 %v532
        %566 = vmatprep.subr.bf16.mxu0 %v530
        %567 = vmatpush1.bf16.msra.mxu0 %v529
        %568 = vmatprep.subr.bf16.mxu0 %v527
        %569 = vmatpush1.bf16.msra.mxu0 %v526
        %570 = vmatprep.subr.bf16.mxu0 %v524
        %571 = vmatpush1.bf16.msra.mxu0 %v523
        %572 = vmatprep.subr.bf16.mxu0 %v521
        %573 = vmatpush1.bf16.msra.mxu0 %v520
        %574 = vmatprep.subr.bf16.mxu0 %v518
        %575 = vmatpush1.bf16.msra.mxu0 %v517
        %576 = vmatprep.subr.bf16.mxu0 %v515
        %577 = vmatpush1.bf16.msra.mxu0 %v514
        %578 = vmatprep.subr.bf16.mxu0 0
        %579 = vmatpush2.bf16.msra.mxu0 0
        %580 = vmatprep.subr.bf16.mxu0 0
        %581 = vmatpush2.bf16.msra.mxu0 0
        %582 = vmatprep.subr.bf16.mxu0 0
        %583 = vmatpush2.bf16.msra.mxu0 0
        %584 = vmatprep.subr.bf16.mxu0 0
        %585 = vmatpush2.bf16.msra.mxu0 0
        %586 = vmatprep.subr.bf16.mxu0 0
        %587 = vmatpush2.bf16.msra.mxu0 0
        %588 = vmatprep.subr.bf16.mxu0 0
        %589 = vmatpush2.bf16.msra.mxu0 0
        %590 = vmatprep.subr.bf16.mxu0 0
        %591 = vmatpush2.bf16.msra.mxu0 0
        %592 = vmatprep.subr.bf16.mxu0 0
        %593 = vmatpush2.bf16.msra.mxu0 0
        %594 = vmatprep.mubr.bf16.mxu0 0
        %595 = vmatmul.mubr.bf16.gmra.mxu0 %v384
        %v596 = vpop.f32.mrf.mxu0
        %v597 = vadd.f32 %v422, %v596
        %v598 = vpop.f32.mrf.mxu0
        %v599 = vadd.f32 %v426, %v598
        %v600 = vpop.f32.mrf.mxu0
        %v601 = vpop.f32.mrf.mxu0
        %602 = vdwg.mxu0
        %603 = vmatprep.subr.bf16.mxu0 0
        %604 = vmatpush1.bf16.msra.mxu0 %v537
        %605 = vmatprep.subr.bf16.mxu0 0
        %606 = vmatpush1.bf16.msra.mxu0 %v534
        %607 = vmatprep.subr.bf16.mxu0 0
        %608 = vmatpush1.bf16.msra.mxu0 %v531
        %609 = vmatprep.subr.bf16.mxu0 0
        %610 = vmatpush1.bf16.msra.mxu0 %v528
        %611 = vmatprep.subr.bf16.mxu0 0
        %612 = vmatpush1.bf16.msra.mxu0 %v525
        %613 = vmatprep.subr.bf16.mxu0 0
        %614 = vmatpush1.bf16.msra.mxu0 %v522
        %615 = vmatprep.subr.bf16.mxu0 0
        %616 = vmatpush1.bf16.msra.mxu0 %v519
        %617 = vmatprep.subr.bf16.mxu0 0
        %618 = vmatpush1.bf16.msra.mxu0 %v516
        %619 = vmatprep.subr.bf16.mxu0 0
        %620 = vmatpush2.bf16.msra.mxu0 0
        %621 = vmatprep.subr.bf16.mxu0 0
        %622 = vmatpush2.bf16.msra.mxu0 0
        %623 = vmatprep.subr.bf16.mxu0 0
        %624 = vmatpush2.bf16.msra.mxu0 0
        %625 = vmatprep.subr.bf16.mxu0 0
        %626 = vmatpush2.bf16.msra.mxu0 0
        %627 = vmatprep.subr.bf16.mxu0 0
        %628 = vmatpush2.bf16.msra.mxu0 0
        %629 = vmatprep.subr.bf16.mxu0 0
        %630 = vmatpush2.bf16.msra.mxu0 0
        %631 = vmatprep.subr.bf16.mxu0 0
        %632 = vmatpush2.bf16.msra.mxu0 0
        %633 = vmatprep.subr.bf16.mxu0 0
        %634 = vmatpush2.bf16.msra.mxu0 0
        %635 = vmatprep.mubr.bf16.mxu0 0
        %636 = vmatmul.mubr.bf16.gmra.mxu0 %v384
        %v637 = vpop.f32.mrf.mxu0
        %v638 = vadd.f32 %v430, %v637
        %v639 = vpop.f32.mrf.mxu0
        %v640 = vpop.f32.mrf.mxu0
        %v641 = vpop.f32.mrf.mxu0
        %642 = vdwg.mxu0
        %v643 = vmul.f32 %v597, 0.25
        %v644 = vpack.c.bf16 %v643, %v643
        %v645 = vpack.c.bf16 %v599, %v599
        %v646 = vpack.c.bf16 %v638, %v638
        %648 = vrot.lane.b32.xlu0 %v644, 112
        %v649 = vpop.permute.xlu0 %648
        %650 = vrot.lane.b32.xlu0 %v644, 96
        %v651 = vpop.permute.xlu0 %650
        %652 = vrot.lane.b32.xlu0 %v644, 80
        %v653 = vpop.permute.xlu0 %652
        %654 = vrot.lane.b32.xlu0 %v644, 64
        %v655 = vpop.permute.xlu0 %654
        %656 = vrot.lane.b32.xlu0 %v644, 48
        %v657 = vpop.permute.xlu0 %656
        %658 = vrot.lane.b32.xlu0 %v644, 32
        %v659 = vpop.permute.xlu0 %658
        %660 = vrot.lane.b32.xlu0 %v644, 16
        %v661 = vpop.permute.xlu0 %660
        %663 = vrot.lane.b32.xlu0 %v645, 112
        %v664 = vpop.permute.xlu0 %663
        %665 = vrot.lane.b32.xlu0 %v645, 96
        %v666 = vpop.permute.xlu0 %665
        %667 = vrot.lane.b32.xlu0 %v645, 80
        %v668 = vpop.permute.xlu0 %667
        %669 = vrot.lane.b32.xlu0 %v645, 64
        %v670 = vpop.permute.xlu0 %669
        %671 = vrot.lane.b32.xlu0 %v645, 48
        %v672 = vpop.permute.xlu0 %671
        %673 = vrot.lane.b32.xlu0 %v645, 32
        %v674 = vpop.permute.xlu0 %673
        %675 = vrot.lane.b32.xlu0 %v645, 16
        %v676 = vpop.permute.xlu0 %675
        %678 = vrot.lane.b32.xlu0 %v646, 112
        %v679 = vpop.permute.xlu0 %678
        %680 = vrot.lane.b32.xlu0 %v646, 96
        %v681 = vpop.permute.xlu0 %680
        %682 = vrot.lane.b32.xlu0 %v646, 80
        %v683 = vpop.permute.xlu0 %682
        %684 = vrot.lane.b32.xlu0 %v646, 64
        %v685 = vpop.permute.xlu0 %684
        %686 = vrot.lane.b32.xlu0 %v646, 48
        %v687 = vpop.permute.xlu0 %686
        %688 = vrot.lane.b32.xlu0 %v646, 32
        %v689 = vpop.permute.xlu0 %688
        %690 = vrot.lane.b32.xlu0 %v646, 16
        %v691 = vpop.permute.xlu0 %690
        %vm692 = vcmask 130048
        %v694 = vsel %vm692, %v644, 0
        %v697 = vsel %vm692, %v645, 0
        %699 = vmatprep.subr.bf16.mxu0 0
        %700 = vmatpush1.bf16.xpose.msra.mxu0 0
        %701 = vmatprep.subr.bf16.mxu0 0
        %702 = vmatpush1.bf16.xpose.msra.mxu0 0
        %703 = vmatprep.subr.bf16.mxu0 0
        %704 = vmatpush1.bf16.xpose.msra.mxu0 0
        %705 = vmatprep.subr.bf16.mxu0 0
        %706 = vmatpush1.bf16.xpose.msra.mxu0 0
        %707 = vmatprep.subr.bf16.mxu0 0
        %708 = vmatpush1.bf16.xpose.msra.mxu0 0
        %709 = vmatprep.subr.bf16.mxu0 0
        %710 = vmatpush1.bf16.xpose.msra.mxu0 0
        %711 = vmatprep.subr.bf16.mxu0 0
        %712 = vmatpush1.bf16.xpose.msra.mxu0 0
        %713 = vmatprep.subr.bf16.mxu0 0
        %714 = vmatpush1.bf16.xpose.msra.mxu0 %v697
        %715 = vmatprep.subr.bf16.mxu0 0
        %716 = vmatpush2.bf16.xpose.msra.mxu0 0
        %717 = vmatprep.subr.bf16.mxu0 0
        %718 = vmatpush2.bf16.xpose.msra.mxu0 0
        %719 = vmatprep.subr.bf16.mxu0 0
        %720 = vmatpush2.bf16.xpose.msra.mxu0 0
        %721 = vmatprep.subr.bf16.mxu0 0
        %722 = vmatpush2.bf16.xpose.msra.mxu0 0
        %723 = vmatprep.subr.bf16.mxu0 0
        %724 = vmatpush2.bf16.xpose.msra.mxu0 0
        %725 = vmatprep.subr.bf16.mxu0 0
        %726 = vmatpush2.bf16.xpose.msra.mxu0 0
        %727 = vmatprep.subr.bf16.mxu0 0
        %728 = vmatpush2.bf16.xpose.msra.mxu0 0
        %729 = vmatprep.subr.bf16.mxu0 0
        %730 = vmatpush2.bf16.xpose.msra.mxu0 0
        %731 = vmatprep.mubr.bf16.mxu0 0
        %732 = vmatmul.mubr.bf16.gmra.mxu0 %v694
        %v733 = vpop.f32.mrf.mxu0
        %v734 = vadd.f32 0.0, %v733
        %v735 = vpop.f32.mrf.mxu0
        %v736 = vpop.f32.mrf.mxu0
        %v737 = vpop.f32.mrf.mxu0
        %738 = vdwg.mxu0
        %v740 = vsel %vm692, %v649, 0
        %v743 = vsel %vm692, %v664, 0
        %745 = vmatprep.subr.bf16.mxu0 0
        %746 = vmatpush1.bf16.xpose.msra.mxu0 0
        %747 = vmatprep.subr.bf16.mxu0 0
        %748 = vmatpush1.bf16.xpose.msra.mxu0 0
        %749 = vmatprep.subr.bf16.mxu0 0
        %750 = vmatpush1.bf16.xpose.msra.mxu0 0
        %751 = vmatprep.subr.bf16.mxu0 0
        %752 = vmatpush1.bf16.xpose.msra.mxu0 0
        %753 = vmatprep.subr.bf16.mxu0 0
        %754 = vmatpush1.bf16.xpose.msra.mxu0 0
        %755 = vmatprep.subr.bf16.mxu0 0
        %756 = vmatpush1.bf16.xpose.msra.mxu0 0
        %757 = vmatprep.subr.bf16.mxu0 0
        %758 = vmatpush1.bf16.xpose.msra.mxu0 0
        %759 = vmatprep.subr.bf16.mxu0 0
        %760 = vmatpush1.bf16.xpose.msra.mxu0 %v743
        %761 = vmatprep.subr.bf16.mxu0 0
        %762 = vmatpush2.bf16.xpose.msra.mxu0 0
        %763 = vmatprep.subr.bf16.mxu0 0
        %764 = vmatpush2.bf16.xpose.msra.mxu0 0
        %765 = vmatprep.subr.bf16.mxu0 0
        %766 = vmatpush2.bf16.xpose.msra.mxu0 0
        %767 = vmatprep.subr.bf16.mxu0 0
        %768 = vmatpush2.bf16.xpose.msra.mxu0 0
        %769 = vmatprep.subr.bf16.mxu0 0
        %770 = vmatpush2.bf16.xpose.msra.mxu0 0
        %771 = vmatprep.subr.bf16.mxu0 0
        %772 = vmatpush2.bf16.xpose.msra.mxu0 0
        %773 = vmatprep.subr.bf16.mxu0 0
        %774 = vmatpush2.bf16.xpose.msra.mxu0 0
        %775 = vmatprep.subr.bf16.mxu0 0
        %776 = vmatpush2.bf16.xpose.msra.mxu0 0
        %777 = vmatprep.mubr.bf16.mxu0 0
        %778 = vmatmul.mubr.bf16.gmra.mxu0 %v740
        %v779 = vpop.f32.mrf.mxu0
        %v780 = vadd.f32 0.0, %v779
        %v781 = vpop.f32.mrf.mxu0
        %v782 = vpop.f32.mrf.mxu0
        %v783 = vpop.f32.mrf.mxu0
        %784 = vdwg.mxu0
        %v786 = vsel %vm692, %v651, 0
        %v789 = vsel %vm692, %v666, 0
        %791 = vmatprep.subr.bf16.mxu0 0
        %792 = vmatpush1.bf16.xpose.msra.mxu0 0
        %793 = vmatprep.subr.bf16.mxu0 0
        %794 = vmatpush1.bf16.xpose.msra.mxu0 0
        %795 = vmatprep.subr.bf16.mxu0 0
        %796 = vmatpush1.bf16.xpose.msra.mxu0 0
        %797 = vmatprep.subr.bf16.mxu0 0
        %798 = vmatpush1.bf16.xpose.msra.mxu0 0
        %799 = vmatprep.subr.bf16.mxu0 0
        %800 = vmatpush1.bf16.xpose.msra.mxu0 0
        %801 = vmatprep.subr.bf16.mxu0 0
        %802 = vmatpush1.bf16.xpose.msra.mxu0 0
        %803 = vmatprep.subr.bf16.mxu0 0
        %804 = vmatpush1.bf16.xpose.msra.mxu0 0
        %805 = vmatprep.subr.bf16.mxu0 0
        %806 = vmatpush1.bf16.xpose.msra.mxu0 %v789
        %807 = vmatprep.subr.bf16.mxu0 0
        %808 = vmatpush2.bf16.xpose.msra.mxu0 0
        %809 = vmatprep.subr.bf16.mxu0 0
        %810 = vmatpush2.bf16.xpose.msra.mxu0 0
        %811 = vmatprep.subr.bf16.mxu0 0
        %812 = vmatpush2.bf16.xpose.msra.mxu0 0
        %813 = vmatprep.subr.bf16.mxu0 0
        %814 = vmatpush2.bf16.xpose.msra.mxu0 0
        %815 = vmatprep.subr.bf16.mxu0 0
        %816 = vmatpush2.bf16.xpose.msra.mxu0 0
        %817 = vmatprep.subr.bf16.mxu0 0
        %818 = vmatpush2.bf16.xpose.msra.mxu0 0
        %819 = vmatprep.subr.bf16.mxu0 0
        %820 = vmatpush2.bf16.xpose.msra.mxu0 0
        %821 = vmatprep.subr.bf16.mxu0 0
        %822 = vmatpush2.bf16.xpose.msra.mxu0 0
        %823 = vmatprep.mubr.bf16.mxu0 0
        %824 = vmatmul.mubr.bf16.gmra.mxu0 %v786
        %v825 = vpop.f32.mrf.mxu0
        %v826 = vadd.f32 0.0, %v825
        %v827 = vpop.f32.mrf.mxu0
        %v828 = vpop.f32.mrf.mxu0
        %v829 = vpop.f32.mrf.mxu0
        %830 = vdwg.mxu0
        %v832 = vsel %vm692, %v653, 0
        %v835 = vsel %vm692, %v668, 0
        %837 = vmatprep.subr.bf16.mxu0 0
        %838 = vmatpush1.bf16.xpose.msra.mxu0 0
        %839 = vmatprep.subr.bf16.mxu0 0
        %840 = vmatpush1.bf16.xpose.msra.mxu0 0
        %841 = vmatprep.subr.bf16.mxu0 0
        %842 = vmatpush1.bf16.xpose.msra.mxu0 0
        %843 = vmatprep.subr.bf16.mxu0 0
        %844 = vmatpush1.bf16.xpose.msra.mxu0 0
        %845 = vmatprep.subr.bf16.mxu0 0
        %846 = vmatpush1.bf16.xpose.msra.mxu0 0
        %847 = vmatprep.subr.bf16.mxu0 0
        %848 = vmatpush1.bf16.xpose.msra.mxu0 0
        %849 = vmatprep.subr.bf16.mxu0 0
        %850 = vmatpush1.bf16.xpose.msra.mxu0 0
        %851 = vmatprep.subr.bf16.mxu0 0
        %852 = vmatpush1.bf16.xpose.msra.mxu0 %v835
        %853 = vmatprep.subr.bf16.mxu0 0
        %854 = vmatpush2.bf16.xpose.msra.mxu0 0
        %855 = vmatprep.subr.bf16.mxu0 0
        %856 = vmatpush2.bf16.xpose.msra.mxu0 0
        %857 = vmatprep.subr.bf16.mxu0 0
        %858 = vmatpush2.bf16.xpose.msra.mxu0 0
        %859 = vmatprep.subr.bf16.mxu0 0
        %860 = vmatpush2.bf16.xpose.msra.mxu0 0
        %861 = vmatprep.subr.bf16.mxu0 0
        %862 = vmatpush2.bf16.xpose.msra.mxu0 0
        %863 = vmatprep.subr.bf16.mxu0 0
        %864 = vmatpush2.bf16.xpose.msra.mxu0 0
        %865 = vmatprep.subr.bf16.mxu0 0
        %866 = vmatpush2.bf16.xpose.msra.mxu0 0
        %867 = vmatprep.subr.bf16.mxu0 0
        %868 = vmatpush2.bf16.xpose.msra.mxu0 0
        %869 = vmatprep.mubr.bf16.mxu0 0
        %870 = vmatmul.mubr.bf16.gmra.mxu0 %v832
        %v871 = vpop.f32.mrf.mxu0
        %v872 = vadd.f32 0.0, %v871
        %v873 = vpop.f32.mrf.mxu0
        %v874 = vpop.f32.mrf.mxu0
        %v875 = vpop.f32.mrf.mxu0
        %876 = vdwg.mxu0
        %v878 = vsel %vm692, %v655, 0
        %v881 = vsel %vm692, %v670, 0
        %883 = vmatprep.subr.bf16.mxu0 0
        %884 = vmatpush1.bf16.xpose.msra.mxu0 0
        %885 = vmatprep.subr.bf16.mxu0 0
        %886 = vmatpush1.bf16.xpose.msra.mxu0 0
        %887 = vmatprep.subr.bf16.mxu0 0
        %888 = vmatpush1.bf16.xpose.msra.mxu0 0
        %889 = vmatprep.subr.bf16.mxu0 0
        %890 = vmatpush1.bf16.xpose.msra.mxu0 0
        %891 = vmatprep.subr.bf16.mxu0 0
        %892 = vmatpush1.bf16.xpose.msra.mxu0 0
        %893 = vmatprep.subr.bf16.mxu0 0
        %894 = vmatpush1.bf16.xpose.msra.mxu0 0
        %895 = vmatprep.subr.bf16.mxu0 0
        %896 = vmatpush1.bf16.xpose.msra.mxu0 0
        %897 = vmatprep.subr.bf16.mxu0 0
        %898 = vmatpush1.bf16.xpose.msra.mxu0 %v881
        %899 = vmatprep.subr.bf16.mxu0 0
        %900 = vmatpush2.bf16.xpose.msra.mxu0 0
        %901 = vmatprep.subr.bf16.mxu0 0
        %902 = vmatpush2.bf16.xpose.msra.mxu0 0
        %903 = vmatprep.subr.bf16.mxu0 0
        %904 = vmatpush2.bf16.xpose.msra.mxu0 0
        %905 = vmatprep.subr.bf16.mxu0 0
        %906 = vmatpush2.bf16.xpose.msra.mxu0 0
        %907 = vmatprep.subr.bf16.mxu0 0
        %908 = vmatpush2.bf16.xpose.msra.mxu0 0
        %909 = vmatprep.subr.bf16.mxu0 0
        %910 = vmatpush2.bf16.xpose.msra.mxu0 0
        %911 = vmatprep.subr.bf16.mxu0 0
        %912 = vmatpush2.bf16.xpose.msra.mxu0 0
        %913 = vmatprep.subr.bf16.mxu0 0
        %914 = vmatpush2.bf16.xpose.msra.mxu0 0
        %915 = vmatprep.mubr.bf16.mxu0 0
        %916 = vmatmul.mubr.bf16.gmra.mxu0 %v878
        %v917 = vpop.f32.mrf.mxu0
        %v918 = vadd.f32 0.0, %v917
        %v919 = vpop.f32.mrf.mxu0
        %v920 = vpop.f32.mrf.mxu0
        %v921 = vpop.f32.mrf.mxu0
        %922 = vdwg.mxu0
        %v924 = vsel %vm692, %v657, 0
        %v927 = vsel %vm692, %v672, 0
        %929 = vmatprep.subr.bf16.mxu0 0
        %930 = vmatpush1.bf16.xpose.msra.mxu0 0
        %931 = vmatprep.subr.bf16.mxu0 0
        %932 = vmatpush1.bf16.xpose.msra.mxu0 0
        %933 = vmatprep.subr.bf16.mxu0 0
        %934 = vmatpush1.bf16.xpose.msra.mxu0 0
        %935 = vmatprep.subr.bf16.mxu0 0
        %936 = vmatpush1.bf16.xpose.msra.mxu0 0
        %937 = vmatprep.subr.bf16.mxu0 0
        %938 = vmatpush1.bf16.xpose.msra.mxu0 0
        %939 = vmatprep.subr.bf16.mxu0 0
        %940 = vmatpush1.bf16.xpose.msra.mxu0 0
        %941 = vmatprep.subr.bf16.mxu0 0
        %942 = vmatpush1.bf16.xpose.msra.mxu0 0
        %943 = vmatprep.subr.bf16.mxu0 0
        %944 = vmatpush1.bf16.xpose.msra.mxu0 %v927
        %945 = vmatprep.subr.bf16.mxu0 0
        %946 = vmatpush2.bf16.xpose.msra.mxu0 0
        %947 = vmatprep.subr.bf16.mxu0 0
        %948 = vmatpush2.bf16.xpose.msra.mxu0 0
        %949 = vmatprep.subr.bf16.mxu0 0
        %950 = vmatpush2.bf16.xpose.msra.mxu0 0
        %951 = vmatprep.subr.bf16.mxu0 0
        %952 = vmatpush2.bf16.xpose.msra.mxu0 0
        %953 = vmatprep.subr.bf16.mxu0 0
        %954 = vmatpush2.bf16.xpose.msra.mxu0 0
        %955 = vmatprep.subr.bf16.mxu0 0
        %956 = vmatpush2.bf16.xpose.msra.mxu0 0
        %957 = vmatprep.subr.bf16.mxu0 0
        %958 = vmatpush2.bf16.xpose.msra.mxu0 0
        %959 = vmatprep.subr.bf16.mxu0 0
        %960 = vmatpush2.bf16.xpose.msra.mxu0 0
        %961 = vmatprep.mubr.bf16.mxu0 0
        %962 = vmatmul.mubr.bf16.gmra.mxu0 %v924
        %v963 = vpop.f32.mrf.mxu0
        %v964 = vadd.f32 0.0, %v963
        %v965 = vpop.f32.mrf.mxu0
        %v966 = vpop.f32.mrf.mxu0
        %v967 = vpop.f32.mrf.mxu0
        %968 = vdwg.mxu0
        %v970 = vsel %vm692, %v659, 0
        %v973 = vsel %vm692, %v674, 0
        %975 = vmatprep.subr.bf16.mxu0 0
        %976 = vmatpush1.bf16.xpose.msra.mxu0 0
        %977 = vmatprep.subr.bf16.mxu0 0
        %978 = vmatpush1.bf16.xpose.msra.mxu0 0
        %979 = vmatprep.subr.bf16.mxu0 0
        %980 = vmatpush1.bf16.xpose.msra.mxu0 0
        %981 = vmatprep.subr.bf16.mxu0 0
        %982 = vmatpush1.bf16.xpose.msra.mxu0 0
        %983 = vmatprep.subr.bf16.mxu0 0
        %984 = vmatpush1.bf16.xpose.msra.mxu0 0
        %985 = vmatprep.subr.bf16.mxu0 0
        %986 = vmatpush1.bf16.xpose.msra.mxu0 0
        %987 = vmatprep.subr.bf16.mxu0 0
        %988 = vmatpush1.bf16.xpose.msra.mxu0 0
        %989 = vmatprep.subr.bf16.mxu0 0
        %990 = vmatpush1.bf16.xpose.msra.mxu0 %v973
        %991 = vmatprep.subr.bf16.mxu0 0
        %992 = vmatpush2.bf16.xpose.msra.mxu0 0
        %993 = vmatprep.subr.bf16.mxu0 0
        %994 = vmatpush2.bf16.xpose.msra.mxu0 0
        %995 = vmatprep.subr.bf16.mxu0 0
        %996 = vmatpush2.bf16.xpose.msra.mxu0 0
        %997 = vmatprep.subr.bf16.mxu0 0
        %998 = vmatpush2.bf16.xpose.msra.mxu0 0
        %999 = vmatprep.subr.bf16.mxu0 0
        %1000 = vmatpush2.bf16.xpose.msra.mxu0 0
        %1001 = vmatprep.subr.bf16.mxu0 0
        %1002 = vmatpush2.bf16.xpose.msra.mxu0 0
        %1003 = vmatprep.subr.bf16.mxu0 0
        %1004 = vmatpush2.bf16.xpose.msra.mxu0 0
        %1005 = vmatprep.subr.bf16.mxu0 0
        %1006 = vmatpush2.bf16.xpose.msra.mxu0 0
        %1007 = vmatprep.mubr.bf16.mxu0 0
        %1008 = vmatmul.mubr.bf16.gmra.mxu0 %v970
        %v1009 = vpop.f32.mrf.mxu0
        %v1010 = vadd.f32 0.0, %v1009
        %v1011 = vpop.f32.mrf.mxu0
        %v1012 = vpop.f32.mrf.mxu0
        %v1013 = vpop.f32.mrf.mxu0
        %1014 = vdwg.mxu0
        %v1016 = vsel %vm692, %v661, 0
        %v1019 = vsel %vm692, %v676, 0
        %1021 = vmatprep.subr.bf16.mxu0 0
        %1022 = vmatpush1.bf16.xpose.msra.mxu0 0
        %1023 = vmatprep.subr.bf16.mxu0 0
        %1024 = vmatpush1.bf16.xpose.msra.mxu0 0
        %1025 = vmatprep.subr.bf16.mxu0 0
        %1026 = vmatpush1.bf16.xpose.msra.mxu0 0
        %1027 = vmatprep.subr.bf16.mxu0 0
        %1028 = vmatpush1.bf16.xpose.msra.mxu0 0
        %1029 = vmatprep.subr.bf16.mxu0 0
        %1030 = vmatpush1.bf16.xpose.msra.mxu0 0
        %1031 = vmatprep.subr.bf16.mxu0 0
        %1032 = vmatpush1.bf16.xpose.msra.mxu0 0
        %1033 = vmatprep.subr.bf16.mxu0 0
        %1034 = vmatpush1.bf16.xpose.msra.mxu0 0
        %1035 = vmatprep.subr.bf16.mxu0 0
        %1036 = vmatpush1.bf16.xpose.msra.mxu0 %v1019
        %1037 = vmatprep.subr.bf16.mxu0 0
        %1038 = vmatpush2.bf16.xpose.msra.mxu0 0
        %1039 = vmatprep.subr.bf16.mxu0 0
        %1040 = vmatpush2.bf16.xpose.msra.mxu0 0
        %1041 = vmatprep.subr.bf16.mxu0 0
        %1042 = vmatpush2.bf16.xpose.msra.mxu0 0
        %1043 = vmatprep.subr.bf16.mxu0 0
        %1044 = vmatpush2.bf16.xpose.msra.mxu0 0
        %1045 = vmatprep.subr.bf16.mxu0 0
        %1046 = vmatpush2.bf16.xpose.msra.mxu0 0
        %1047 = vmatprep.subr.bf16.mxu0 0
        %1048 = vmatpush2.bf16.xpose.msra.mxu0 0
        %1049 = vmatprep.subr.bf16.mxu0 0
        %1050 = vmatpush2.bf16.xpose.msra.mxu0 0
        %1051 = vmatprep.subr.bf16.mxu0 0
        %1052 = vmatpush2.bf16.xpose.msra.mxu0 0
        %1053 = vmatprep.mubr.bf16.mxu0 0
        %1054 = vmatmul.mubr.bf16.gmra.mxu0 %v1016
        %v1055 = vpop.f32.mrf.mxu0
        %v1056 = vadd.f32 0.0, %v1055
        %v1057 = vpop.f32.mrf.mxu0
        %v1058 = vpop.f32.mrf.mxu0
        %v1059 = vpop.f32.mrf.mxu0
        %1060 = vdwg.mxu0
        %vm1061 = vcmask 64512
        %v1062 = vsel %vm1061, %v734, -inf
        %1063 = vmax.xlane.f32.xlu0 %v1062
        %v1064 = vpop.xlane.xlu0 %1063
        %v1065 = vsel %vm1061, %v780, -inf
        %1066 = vmax.xlane.f32.xlu0 %v1065
        %v1067 = vpop.xlane.xlu0 %1066
        %v1068 = vsel %vm1061, %v826, -inf
        %1069 = vmax.xlane.f32.xlu0 %v1068
        %v1070 = vpop.xlane.xlu0 %1069
        %v1071 = vsel %vm1061, %v872, -inf
        %1072 = vmax.xlane.f32.xlu0 %v1071
        %v1073 = vpop.xlane.xlu0 %1072
        %v1074 = vsel %vm1061, %v918, -inf
        %1075 = vmax.xlane.f32.xlu0 %v1074
        %v1076 = vpop.xlane.xlu0 %1075
        %v1077 = vsel %vm1061, %v964, -inf
        %1078 = vmax.xlane.f32.xlu0 %v1077
        %v1079 = vpop.xlane.xlu0 %1078
        %v1080 = vsel %vm1061, %v1010, -inf
        %1081 = vmax.xlane.f32.xlu0 %v1080
        %v1082 = vpop.xlane.xlu0 %1081
        %v1083 = vsel %vm1061, %v1056, -inf
        %1084 = vmax.xlane.f32.xlu0 %v1083
        %v1085 = vpop.xlane.xlu0 %1084
        %v1086 = vsub.f32 %v734, %v1064
        %v1087 = vsub.f32 %v780, %v1067
        %v1088 = vsub.f32 %v826, %v1070
        %v1089 = vsub.f32 %v872, %v1073
        %v1090 = vsub.f32 %v918, %v1076
        %v1091 = vsub.f32 %v964, %v1079
        %v1092 = vsub.f32 %v1010, %v1082
        %v1093 = vsub.f32 %v1056, %v1085
        %v1094 = vmul.f32 %v1086, 1.442695
        %v1095 = vpow.pop %v1094
        %v1096 = vmul.f32 %v1087, 1.442695
        %v1097 = vpow.pop %v1096
        %v1098 = vmul.f32 %v1088, 1.442695
        %v1099 = vpow.pop %v1098
        %v1100 = vmul.f32 %v1089, 1.442695
        %v1101 = vpow.pop %v1100
        %v1102 = vmul.f32 %v1090, 1.442695
        %v1103 = vpow.pop %v1102
        %v1104 = vmul.f32 %v1091, 1.442695
        %v1105 = vpow.pop %v1104
        %v1106 = vmul.f32 %v1092, 1.442695
        %v1107 = vpow.pop %v1106
        %v1108 = vmul.f32 %v1093, 1.442695
        %v1109 = vpow.pop %v1108
        %v1110 = vsel %vm1061, %v1095, 0.0
        %1111 = vadd.xlane.f32.xlu0 %v1110
        %v1112 = vpop.xlane.xlu0 %1111
        %v1113 = vsel %vm1061, %v1097, 0.0
        %1114 = vadd.xlane.f32.xlu0 %v1113
        %v1115 = vpop.xlane.xlu0 %1114
        %v1116 = vsel %vm1061, %v1099, 0.0
        %1117 = vadd.xlane.f32.xlu0 %v1116
        %v1118 = vpop.xlane.xlu0 %1117
        %v1119 = vsel %vm1061, %v1101, 0.0
        %1120 = vadd.xlane.f32.xlu0 %v1119
        %v1121 = vpop.xlane.xlu0 %1120
        %v1122 = vsel %vm1061, %v1103, 0.0
        %1123 = vadd.xlane.f32.xlu0 %v1122
        %v1124 = vpop.xlane.xlu0 %1123
        %v1125 = vsel %vm1061, %v1105, 0.0
        %1126 = vadd.xlane.f32.xlu0 %v1125
        %v1127 = vpop.xlane.xlu0 %1126
        %v1128 = vsel %vm1061, %v1107, 0.0
        %1129 = vadd.xlane.f32.xlu0 %v1128
        %v1130 = vpop.xlane.xlu0 %1129
        %v1131 = vsel %vm1061, %v1109, 0.0
        %1132 = vadd.xlane.f32.xlu0 %v1131
        %v1133 = vpop.xlane.xlu0 %1132
        %v1134 = vpack.c.bf16 %v1095, %v1095
        %v1135 = vpack.c.bf16 %v1097, %v1097
        %v1136 = vpack.c.bf16 %v1099, %v1099
        %v1137 = vpack.c.bf16 %v1101, %v1101
        %v1138 = vpack.c.bf16 %v1103, %v1103
        %v1139 = vpack.c.bf16 %v1105, %v1105
        %v1140 = vpack.c.bf16 %v1107, %v1107
        %v1141 = vpack.c.bf16 %v1109, %v1109
        %v1143 = vsel %vm1061, %v1134, 0
        %vm1145 = vcmask 1043456
        %v1147 = vsel %vm1145, %v646, 0
        %1149 = vmatprep.subr.bf16.mxu0 0
        %1150 = vmatpush1.bf16.msra.mxu0 0
        %1151 = vmatprep.subr.bf16.mxu0 0
        %1152 = vmatpush1.bf16.msra.mxu0 0
        %1153 = vmatprep.subr.bf16.mxu0 0
        %1154 = vmatpush1.bf16.msra.mxu0 0
        %1155 = vmatprep.subr.bf16.mxu0 0
        %1156 = vmatpush1.bf16.msra.mxu0 0
        %1157 = vmatprep.subr.bf16.mxu0 0
        %1158 = vmatpush1.bf16.msra.mxu0 0
        %1159 = vmatprep.subr.bf16.mxu0 0
        %1160 = vmatpush1.bf16.msra.mxu0 0
        %1161 = vmatprep.subr.bf16.mxu0 0
        %1162 = vmatpush1.bf16.msra.mxu0 0
        %1163 = vmatprep.subr.bf16.mxu0 0
        %1164 = vmatpush1.bf16.msra.mxu0 %v1147
        %1165 = vmatprep.subr.bf16.mxu0 0
        %1166 = vmatpush2.bf16.msra.mxu0 0
        %1167 = vmatprep.subr.bf16.mxu0 0
        %1168 = vmatpush2.bf16.msra.mxu0 0
        %1169 = vmatprep.subr.bf16.mxu0 0
        %1170 = vmatpush2.bf16.msra.mxu0 0
        %1171 = vmatprep.subr.bf16.mxu0 0
        %1172 = vmatpush2.bf16.msra.mxu0 0
        %1173 = vmatprep.subr.bf16.mxu0 0
        %1174 = vmatpush2.bf16.msra.mxu0 0
        %1175 = vmatprep.subr.bf16.mxu0 0
        %1176 = vmatpush2.bf16.msra.mxu0 0
        %1177 = vmatprep.subr.bf16.mxu0 0
        %1178 = vmatpush2.bf16.msra.mxu0 0
        %1179 = vmatprep.subr.bf16.mxu0 0
        %1180 = vmatpush2.bf16.msra.mxu0 0
        %1181 = vmatprep.mubr.bf16.mxu0 0
        %1182 = vmatmul.mubr.bf16.gmra.mxu0 %v1143
        %v1183 = vpop.f32.mrf.mxu0
        %v1184 = vadd.f32 0.0, %v1183
        %v1185 = vpop.f32.mrf.mxu0
        %v1186 = vpop.f32.mrf.mxu0
        %v1187 = vpop.f32.mrf.mxu0
        %1188 = vdwg.mxu0
        %v1190 = vsel %vm1061, %v1135, 0
        %v1193 = vsel %vm1145, %v679, 0
        %1195 = vmatprep.subr.bf16.mxu0 0
        %1196 = vmatpush1.bf16.msra.mxu0 0
        %1197 = vmatprep.subr.bf16.mxu0 0
        %1198 = vmatpush1.bf16.msra.mxu0 0
        %1199 = vmatprep.subr.bf16.mxu0 0
        %1200 = vmatpush1.bf16.msra.mxu0 0
        %1201 = vmatprep.subr.bf16.mxu0 0
        %1202 = vmatpush1.bf16.msra.mxu0 0
        %1203 = vmatprep.subr.bf16.mxu0 0
        %1204 = vmatpush1.bf16.msra.mxu0 0
        %1205 = vmatprep.subr.bf16.mxu0 0
        %1206 = vmatpush1.bf16.msra.mxu0 0
        %1207 = vmatprep.subr.bf16.mxu0 0
        %1208 = vmatpush1.bf16.msra.mxu0 0
        %1209 = vmatprep.subr.bf16.mxu0 0
        %1210 = vmatpush1.bf16.msra.mxu0 %v1193
        %1211 = vmatprep.subr.bf16.mxu0 0
        %1212 = vmatpush2.bf16.msra.mxu0 0
        %1213 = vmatprep.subr.bf16.mxu0 0
        %1214 = vmatpush2.bf16.msra.mxu0 0
        %1215 = vmatprep.subr.bf16.mxu0 0
        %1216 = vmatpush2.bf16.msra.mxu0 0
        %1217 = vmatprep.subr.bf16.mxu0 0
        %1218 = vmatpush2.bf16.msra.mxu0 0
        %1219 = vmatprep.subr.bf16.mxu0 0
        %1220 = vmatpush2.bf16.msra.mxu0 0
        %1221 = vmatprep.subr.bf16.mxu0 0
        %1222 = vmatpush2.bf16.msra.mxu0 0
        %1223 = vmatprep.subr.bf16.mxu0 0
        %1224 = vmatpush2.bf16.msra.mxu0 0
        %1225 = vmatprep.subr.bf16.mxu0 0
        %1226 = vmatpush2.bf16.msra.mxu0 0
        %1227 = vmatprep.mubr.bf16.mxu0 0
        %1228 = vmatmul.mubr.bf16.gmra.mxu0 %v1190
        %v1229 = vpop.f32.mrf.mxu0
        %v1230 = vadd.f32 0.0, %v1229
        %v1231 = vpop.f32.mrf.mxu0
        %v1232 = vpop.f32.mrf.mxu0
        %v1233 = vpop.f32.mrf.mxu0
        %1234 = vdwg.mxu0
        %v1236 = vsel %vm1061, %v1136, 0
        %v1239 = vsel %vm1145, %v681, 0
        %1241 = vmatprep.subr.bf16.mxu0 0
        %1242 = vmatpush1.bf16.msra.mxu0 0
        %1243 = vmatprep.subr.bf16.mxu0 0
        %1244 = vmatpush1.bf16.msra.mxu0 0
        %1245 = vmatprep.subr.bf16.mxu0 0
        %1246 = vmatpush1.bf16.msra.mxu0 0
        %1247 = vmatprep.subr.bf16.mxu0 0
        %1248 = vmatpush1.bf16.msra.mxu0 0
        %1249 = vmatprep.subr.bf16.mxu0 0
        %1250 = vmatpush1.bf16.msra.mxu0 0
        %1251 = vmatprep.subr.bf16.mxu0 0
        %1252 = vmatpush1.bf16.msra.mxu0 0
        %1253 = vmatprep.subr.bf16.mxu0 0
        %1254 = vmatpush1.bf16.msra.mxu0 0
        %1255 = vmatprep.subr.bf16.mxu0 0
        %1256 = vmatpush1.bf16.msra.mxu0 %v1239
        %1257 = vmatprep.subr.bf16.mxu0 0
        %1258 = vmatpush2.bf16.msra.mxu0 0
        %1259 = vmatprep.subr.bf16.mxu0 0
        %1260 = vmatpush2.bf16.msra.mxu0 0
        %1261 = vmatprep.subr.bf16.mxu0 0
        %1262 = vmatpush2.bf16.msra.mxu0 0
        %1263 = vmatprep.subr.bf16.mxu0 0
        %1264 = vmatpush2.bf16.msra.mxu0 0
        %1265 = vmatprep.subr.bf16.mxu0 0
        %1266 = vmatpush2.bf16.msra.mxu0 0
        %1267 = vmatprep.subr.bf16.mxu0 0
        %1268 = vmatpush2.bf16.msra.mxu0 0
        %1269 = vmatprep.subr.bf16.mxu0 0
        %1270 = vmatpush2.bf16.msra.mxu0 0
        %1271 = vmatprep.subr.bf16.mxu0 0
        %1272 = vmatpush2.bf16.msra.mxu0 0
        %1273 = vmatprep.mubr.bf16.mxu0 0
        %1274 = vmatmul.mubr.bf16.gmra.mxu0 %v1236
        %v1275 = vpop.f32.mrf.mxu0
        %v1276 = vadd.f32 0.0, %v1275
        %v1277 = vpop.f32.mrf.mxu0
        %v1278 = vpop.f32.mrf.mxu0
        %v1279 = vpop.f32.mrf.mxu0
        %1280 = vdwg.mxu0
        %v1282 = vsel %vm1061, %v1137, 0
        %v1285 = vsel %vm1145, %v683, 0
        %1287 = vmatprep.subr.bf16.mxu0 0
        %1288 = vmatpush1.bf16.msra.mxu0 0
        %1289 = vmatprep.subr.bf16.mxu0 0
        %1290 = vmatpush1.bf16.msra.mxu0 0
        %1291 = vmatprep.subr.bf16.mxu0 0
        %1292 = vmatpush1.bf16.msra.mxu0 0
        %1293 = vmatprep.subr.bf16.mxu0 0
        %1294 = vmatpush1.bf16.msra.mxu0 0
        %1295 = vmatprep.subr.bf16.mxu0 0
        %1296 = vmatpush1.bf16.msra.mxu0 0
        %1297 = vmatprep.subr.bf16.mxu0 0
        %1298 = vmatpush1.bf16.msra.mxu0 0
        %1299 = vmatprep.subr.bf16.mxu0 0
        %1300 = vmatpush1.bf16.msra.mxu0 0
        %1301 = vmatprep.subr.bf16.mxu0 0
        %1302 = vmatpush1.bf16.msra.mxu0 %v1285
        %1303 = vmatprep.subr.bf16.mxu0 0
        %1304 = vmatpush2.bf16.msra.mxu0 0
        %1305 = vmatprep.subr.bf16.mxu0 0
        %1306 = vmatpush2.bf16.msra.mxu0 0
        %1307 = vmatprep.subr.bf16.mxu0 0
        %1308 = vmatpush2.bf16.msra.mxu0 0
        %1309 = vmatprep.subr.bf16.mxu0 0
        %1310 = vmatpush2.bf16.msra.mxu0 0
        %1311 = vmatprep.subr.bf16.mxu0 0
        %1312 = vmatpush2.bf16.msra.mxu0 0
        %1313 = vmatprep.subr.bf16.mxu0 0
        %1314 = vmatpush2.bf16.msra.mxu0 0
        %1315 = vmatprep.subr.bf16.mxu0 0
        %1316 = vmatpush2.bf16.msra.mxu0 0
        %1317 = vmatprep.subr.bf16.mxu0 0
        %1318 = vmatpush2.bf16.msra.mxu0 0
        %1319 = vmatprep.mubr.bf16.mxu0 0
        %1320 = vmatmul.mubr.bf16.gmra.mxu0 %v1282
        %v1321 = vpop.f32.mrf.mxu0
        %v1322 = vadd.f32 0.0, %v1321
        %v1323 = vpop.f32.mrf.mxu0
        %v1324 = vpop.f32.mrf.mxu0
        %v1325 = vpop.f32.mrf.mxu0
        %1326 = vdwg.mxu0
        %v1328 = vsel %vm1061, %v1138, 0
        %v1331 = vsel %vm1145, %v685, 0
        %1333 = vmatprep.subr.bf16.mxu0 0
        %1334 = vmatpush1.bf16.msra.mxu0 0
        %1335 = vmatprep.subr.bf16.mxu0 0
        %1336 = vmatpush1.bf16.msra.mxu0 0
        %1337 = vmatprep.subr.bf16.mxu0 0
        %1338 = vmatpush1.bf16.msra.mxu0 0
        %1339 = vmatprep.subr.bf16.mxu0 0
        %1340 = vmatpush1.bf16.msra.mxu0 0
        %1341 = vmatprep.subr.bf16.mxu0 0
        %1342 = vmatpush1.bf16.msra.mxu0 0
        %1343 = vmatprep.subr.bf16.mxu0 0
        %1344 = vmatpush1.bf16.msra.mxu0 0
        %1345 = vmatprep.subr.bf16.mxu0 0
        %1346 = vmatpush1.bf16.msra.mxu0 0
        %1347 = vmatprep.subr.bf16.mxu0 0
        %1348 = vmatpush1.bf16.msra.mxu0 %v1331
        %1349 = vmatprep.subr.bf16.mxu0 0
        %1350 = vmatpush2.bf16.msra.mxu0 0
        %1351 = vmatprep.subr.bf16.mxu0 0
        %1352 = vmatpush2.bf16.msra.mxu0 0
        %1353 = vmatprep.subr.bf16.mxu0 0
        %1354 = vmatpush2.bf16.msra.mxu0 0
        %1355 = vmatprep.subr.bf16.mxu0 0
        %1356 = vmatpush2.bf16.msra.mxu0 0
        %1357 = vmatprep.subr.bf16.mxu0 0
        %1358 = vmatpush2.bf16.msra.mxu0 0
        %1359 = vmatprep.subr.bf16.mxu0 0
        %1360 = vmatpush2.bf16.msra.mxu0 0
        %1361 = vmatprep.subr.bf16.mxu0 0
        %1362 = vmatpush2.bf16.msra.mxu0 0
        %1363 = vmatprep.subr.bf16.mxu0 0
        %1364 = vmatpush2.bf16.msra.mxu0 0
        %1365 = vmatprep.mubr.bf16.mxu0 0
        %1366 = vmatmul.mubr.bf16.gmra.mxu0 %v1328
        %v1367 = vpop.f32.mrf.mxu0
        %v1368 = vadd.f32 0.0, %v1367
        %v1369 = vpop.f32.mrf.mxu0
        %v1370 = vpop.f32.mrf.mxu0
        %v1371 = vpop.f32.mrf.mxu0
        %1372 = vdwg.mxu0
        %v1374 = vsel %vm1061, %v1139, 0
        %v1377 = vsel %vm1145, %v687, 0
        %1379 = vmatprep.subr.bf16.mxu0 0
        %1380 = vmatpush1.bf16.msra.mxu0 0
        %1381 = vmatprep.subr.bf16.mxu0 0
        %1382 = vmatpush1.bf16.msra.mxu0 0
        %1383 = vmatprep.subr.bf16.mxu0 0
        %1384 = vmatpush1.bf16.msra.mxu0 0
        %1385 = vmatprep.subr.bf16.mxu0 0
        %1386 = vmatpush1.bf16.msra.mxu0 0
        %1387 = vmatprep.subr.bf16.mxu0 0
        %1388 = vmatpush1.bf16.msra.mxu0 0
        %1389 = vmatprep.subr.bf16.mxu0 0
        %1390 = vmatpush1.bf16.msra.mxu0 0
        %1391 = vmatprep.subr.bf16.mxu0 0
        %1392 = vmatpush1.bf16.msra.mxu0 0
        %1393 = vmatprep.subr.bf16.mxu0 0
        %1394 = vmatpush1.bf16.msra.mxu0 %v1377
        %1395 = vmatprep.subr.bf16.mxu0 0
        %1396 = vmatpush2.bf16.msra.mxu0 0
        %1397 = vmatprep.subr.bf16.mxu0 0
        %1398 = vmatpush2.bf16.msra.mxu0 0
        %1399 = vmatprep.subr.bf16.mxu0 0
        %1400 = vmatpush2.bf16.msra.mxu0 0
        %1401 = vmatprep.subr.bf16.mxu0 0
        %1402 = vmatpush2.bf16.msra.mxu0 0
        %1403 = vmatprep.subr.bf16.mxu0 0
        %1404 = vmatpush2.bf16.msra.mxu0 0
        %1405 = vmatprep.subr.bf16.mxu0 0
        %1406 = vmatpush2.bf16.msra.mxu0 0
        %1407 = vmatprep.subr.bf16.mxu0 0
        %1408 = vmatpush2.bf16.msra.mxu0 0
        %1409 = vmatprep.subr.bf16.mxu0 0
        %1410 = vmatpush2.bf16.msra.mxu0 0
        %1411 = vmatprep.mubr.bf16.mxu0 0
        %1412 = vmatmul.mubr.bf16.gmra.mxu0 %v1374
        %v1413 = vpop.f32.mrf.mxu0
        %v1414 = vadd.f32 0.0, %v1413
        %v1415 = vpop.f32.mrf.mxu0
        %v1416 = vpop.f32.mrf.mxu0
        %v1417 = vpop.f32.mrf.mxu0
        %1418 = vdwg.mxu0
        %v1420 = vsel %vm1061, %v1140, 0
        %v1423 = vsel %vm1145, %v689, 0
        %1425 = vmatprep.subr.bf16.mxu0 0
        %1426 = vmatpush1.bf16.msra.mxu0 0
        %1427 = vmatprep.subr.bf16.mxu0 0
        %1428 = vmatpush1.bf16.msra.mxu0 0
        %1429 = vmatprep.subr.bf16.mxu0 0
        %1430 = vmatpush1.bf16.msra.mxu0 0
        %1431 = vmatprep.subr.bf16.mxu0 0
        %1432 = vmatpush1.bf16.msra.mxu0 0
        %1433 = vmatprep.subr.bf16.mxu0 0
        %1434 = vmatpush1.bf16.msra.mxu0 0
        %1435 = vmatprep.subr.bf16.mxu0 0
        %1436 = vmatpush1.bf16.msra.mxu0 0
        %1437 = vmatprep.subr.bf16.mxu0 0
        %1438 = vmatpush1.bf16.msra.mxu0 0
        %1439 = vmatprep.subr.bf16.mxu0 0
        %1440 = vmatpush1.bf16.msra.mxu0 %v1423
        %1441 = vmatprep.subr.bf16.mxu0 0
        %1442 = vmatpush2.bf16.msra.mxu0 0
        %1443 = vmatprep.subr.bf16.mxu0 0
        %1444 = vmatpush2.bf16.msra.mxu0 0
        %1445 = vmatprep.subr.bf16.mxu0 0
        %1446 = vmatpush2.bf16.msra.mxu0 0
        %1447 = vmatprep.subr.bf16.mxu0 0
        %1448 = vmatpush2.bf16.msra.mxu0 0
        %1449 = vmatprep.subr.bf16.mxu0 0
        %1450 = vmatpush2.bf16.msra.mxu0 0
        %1451 = vmatprep.subr.bf16.mxu0 0
        %1452 = vmatpush2.bf16.msra.mxu0 0
        %1453 = vmatprep.subr.bf16.mxu0 0
        %1454 = vmatpush2.bf16.msra.mxu0 0
        %1455 = vmatprep.subr.bf16.mxu0 0
        %1456 = vmatpush2.bf16.msra.mxu0 0
        %1457 = vmatprep.mubr.bf16.mxu0 0
        %1458 = vmatmul.mubr.bf16.gmra.mxu0 %v1420
        %v1459 = vpop.f32.mrf.mxu0
        %v1460 = vadd.f32 0.0, %v1459
        %v1461 = vpop.f32.mrf.mxu0
        %v1462 = vpop.f32.mrf.mxu0
        %v1463 = vpop.f32.mrf.mxu0
        %1464 = vdwg.mxu0
        %v1466 = vsel %vm1061, %v1141, 0
        %v1469 = vsel %vm1145, %v691, 0
        %1471 = vmatprep.subr.bf16.mxu0 0
        %1472 = vmatpush1.bf16.msra.mxu0 0
        %1473 = vmatprep.subr.bf16.mxu0 0
        %1474 = vmatpush1.bf16.msra.mxu0 0
        %1475 = vmatprep.subr.bf16.mxu0 0
        %1476 = vmatpush1.bf16.msra.mxu0 0
        %1477 = vmatprep.subr.bf16.mxu0 0
        %1478 = vmatpush1.bf16.msra.mxu0 0
        %1479 = vmatprep.subr.bf16.mxu0 0
        %1480 = vmatpush1.bf16.msra.mxu0 0
        %1481 = vmatprep.subr.bf16.mxu0 0
        %1482 = vmatpush1.bf16.msra.mxu0 0
        %1483 = vmatprep.subr.bf16.mxu0 0
        %1484 = vmatpush1.bf16.msra.mxu0 0
        %1485 = vmatprep.subr.bf16.mxu0 0
        %1486 = vmatpush1.bf16.msra.mxu0 %v1469
        %1487 = vmatprep.subr.bf16.mxu0 0
        %1488 = vmatpush2.bf16.msra.mxu0 0
        %1489 = vmatprep.subr.bf16.mxu0 0
        %1490 = vmatpush2.bf16.msra.mxu0 0
        %1491 = vmatprep.subr.bf16.mxu0 0
        %1492 = vmatpush2.bf16.msra.mxu0 0
        %1493 = vmatprep.subr.bf16.mxu0 0
        %1494 = vmatpush2.bf16.msra.mxu0 0
        %1495 = vmatprep.subr.bf16.mxu0 0
        %1496 = vmatpush2.bf16.msra.mxu0 0
        %1497 = vmatprep.subr.bf16.mxu0 0
        %1498 = vmatpush2.bf16.msra.mxu0 0
        %1499 = vmatprep.subr.bf16.mxu0 0
        %1500 = vmatpush2.bf16.msra.mxu0 0
        %1501 = vmatprep.subr.bf16.mxu0 0
        %1502 = vmatpush2.bf16.msra.mxu0 0
        %1503 = vmatprep.mubr.bf16.mxu0 0
        %1504 = vmatmul.mubr.bf16.gmra.mxu0 %v1466
        %v1505 = vpop.f32.mrf.mxu0
        %v1506 = vadd.f32 0.0, %v1505
        %v1507 = vpop.f32.mrf.mxu0
        %v1508 = vpop.f32.mrf.mxu0
        %v1509 = vpop.f32.mrf.mxu0
        %1510 = vdwg.mxu0
        %v1511 = vrcp.pop %v1112
        %v1512 = vrcp.pop %v1115
        %v1513 = vrcp.pop %v1118
        %v1514 = vrcp.pop %v1121
        %v1515 = vrcp.pop %v1124
        %v1516 = vrcp.pop %v1127
        %v1517 = vrcp.pop %v1130
        %v1518 = vrcp.pop %v1133
        %v1519 = vmul.f32 %v1184, %v1511
        %v1520 = vmul.f32 %v1230, %v1512
        %v1521 = vmul.f32 %v1276, %v1513
        %v1522 = vmul.f32 %v1322, %v1514
        %v1523 = vmul.f32 %v1368, %v1515
        %v1524 = vmul.f32 %v1414, %v1516
        %v1525 = vmul.f32 %v1460, %v1517
        %v1526 = vmul.f32 %v1506, %v1518
        %1528 = vrot.lane.b32.xlu0 %v1520, 16
        %v1529 = vpop.permute.xlu0 %1528
        %1532 = vrot.lane.b32.xlu0 %v1521, 32
        %v1533 = vpop.permute.xlu0 %1532
        %1536 = vrot.lane.b32.xlu0 %v1522, 48
        %v1537 = vpop.permute.xlu0 %1536
        %1540 = vrot.lane.b32.xlu0 %v1523, 64
        %v1541 = vpop.permute.xlu0 %1540
        %1544 = vrot.lane.b32.xlu0 %v1524, 80
        %v1545 = vpop.permute.xlu0 %1544
        %1548 = vrot.lane.b32.xlu0 %v1525, 96
        %v1549 = vpop.permute.xlu0 %1548
        %1552 = vrot.lane.b32.xlu0 %v1526, 112
        %v1553 = vpop.permute.xlu0 %1552
        %v1555 = vsel %vm692, %v1519, %v1529
        %vm1556 = vcmask 261120
        %v1557 = vsel %vm1556, %v1555, %v1533
        %vm1558 = vcmask 392192
        %v1559 = vsel %vm1558, %v1557, %v1537
        %vm1560 = vcmask 523264
        %v1561 = vsel %vm1560, %v1559, %v1541
        %vm1562 = vcmask 654336
        %v1563 = vsel %vm1562, %v1561, %v1545
        %vm1564 = vcmask 785408
        %v1565 = vsel %vm1564, %v1563, %v1549
        %vm1566 = vcmask 916480
        %v1567 = vsel %vm1566, %v1565, %v1553
        %v1568 = vpack.c.bf16 %v1567, %v1567
        %v1569 = vld [vmem:[%s3] sm:$0xf]
        %v1570 = vld [vmem:[%s3 + $0x4] sm:$0xf]
        %v1571 = vld [vmem:[%s3 + $0x8] sm:$0xf]
        %v1572 = vld [vmem:[%s3 + $0xc] sm:$0xf]
        %v1573 = vld [vmem:[%s3 + $0x10] sm:$0xf]
        %v1574 = vld [vmem:[%s3 + $0x14] sm:$0xf]
        %v1575 = vld [vmem:[%s3 + $0x18] sm:$0xf]
        %v1576 = vld [vmem:[%s3 + $0x1c] sm:$0xf]
        %v1577 = vld [vmem:[%s3 + $0x20] sm:$0xf]
        %v1578 = vld [vmem:[%s3 + $0x24] sm:$0xf]
        %v1579 = vld [vmem:[%s3 + $0x28] sm:$0xf]
        %v1580 = vld [vmem:[%s3 + $0x2c] sm:$0xf]
        %v1581 = vld [vmem:[%s3 + $0x30] sm:$0xf]
        %v1582 = vld [vmem:[%s3 + $0x34] sm:$0xf]
        %v1583 = vld [vmem:[%s3 + $0x38] sm:$0xf]
        %v1584 = vld [vmem:[%s3 + $0x3c] sm:$0xf]
        %v1585 = vld [vmem:[%s4] sm:$0x1]
        %v1587 = vlaneseq
        %v1588 = vshrl.u32 %v1587, 7
        %v1589 = vsub.s32 0, %v1588
        %v1590 = vrot.slane %v1585, %v1589
        %v1608 = vunpack.c.l.b16 %v1569
        %v1609 = vunpack.c.l.b16 %v1570
        %v1610 = vunpack.c.l.b16 %v1571
        %v1611 = vunpack.c.l.b16 %v1572
        %v1612 = vunpack.c.l.b16 %v1573
        %v1613 = vunpack.c.l.b16 %v1574
        %v1614 = vunpack.c.l.b16 %v1575
        %v1615 = vunpack.c.l.b16 %v1576
        %v1616 = vunpack.c.l.b16 %v1577
        %v1617 = vunpack.c.l.b16 %v1578
        %v1618 = vunpack.c.l.b16 %v1579
        %v1619 = vunpack.c.l.b16 %v1580
        %v1620 = vunpack.c.l.b16 %v1581
        %v1621 = vunpack.c.l.b16 %v1582
        %v1622 = vunpack.c.l.b16 %v1583
        %v1623 = vunpack.c.l.b16 %v1584
        %v1624 = vpack.c.b16 %v1609, %v1608
        %v1625 = vpack.c.b16 %v1611, %v1610
        %v1626 = vpack.c.b16 %v1613, %v1612
        %v1627 = vpack.c.b16 %v1615, %v1614
        %v1628 = vpack.c.b16 %v1617, %v1616
        %v1629 = vpack.c.b16 %v1619, %v1618
        %v1630 = vpack.c.b16 %v1621, %v1620
        %v1631 = vpack.c.b16 %v1623, %v1622
        %1640 = vmatprep.subr.bf16.mxu0 0
        %1641 = vmatpush1.bf16.msra.mxu0 %v1631
        %1642 = vmatprep.subr.bf16.mxu0 0
        %1643 = vmatpush1.bf16.msra.mxu0 %v1630
        %1644 = vmatprep.subr.bf16.mxu0 0
        %1645 = vmatpush1.bf16.msra.mxu0 %v1629
        %1646 = vmatprep.subr.bf16.mxu0 0
        %1647 = vmatpush1.bf16.msra.mxu0 %v1628
        %1648 = vmatprep.subr.bf16.mxu0 0
        %1649 = vmatpush1.bf16.msra.mxu0 %v1627
        %1650 = vmatprep.subr.bf16.mxu0 0
        %1651 = vmatpush1.bf16.msra.mxu0 %v1626
        %1652 = vmatprep.subr.bf16.mxu0 0
        %1653 = vmatpush1.bf16.msra.mxu0 %v1625
        %1654 = vmatprep.subr.bf16.mxu0 0
        %1655 = vmatpush1.bf16.msra.mxu0 %v1624
        %1656 = vmatprep.subr.bf16.mxu0 0
        %1657 = vmatpush2.bf16.msra.mxu0 0
        %1658 = vmatprep.subr.bf16.mxu0 0
        %1659 = vmatpush2.bf16.msra.mxu0 0
        %1660 = vmatprep.subr.bf16.mxu0 0
        %1661 = vmatpush2.bf16.msra.mxu0 0
        %1662 = vmatprep.subr.bf16.mxu0 0
        %1663 = vmatpush2.bf16.msra.mxu0 0
        %1664 = vmatprep.subr.bf16.mxu0 0
        %1665 = vmatpush2.bf16.msra.mxu0 0
        %1666 = vmatprep.subr.bf16.mxu0 0
        %1667 = vmatpush2.bf16.msra.mxu0 0
        %1668 = vmatprep.subr.bf16.mxu0 0
        %1669 = vmatpush2.bf16.msra.mxu0 0
        %1670 = vmatprep.subr.bf16.mxu0 0
        %1671 = vmatpush2.bf16.msra.mxu0 0
        %1672 = vmatprep.mubr.bf16.mxu0 0
        %1673 = vmatmul.mubr.bf16.gmra.mxu0 %v1568
        %v1674 = vpop.f32.mrf.mxu0
        %v1675 = vadd.f32 %v1590, %v1674
        %v1676 = vpop.f32.mrf.mxu0
        %v1677 = vpop.f32.mrf.mxu0
        %v1678 = vpop.f32.mrf.mxu0
        %1679 = vdwg.mxu0
        %v1680 = vadd.f32 %v1675, %v383
        %v1681 = vld [vmem:[%s5] sm:$0x1]
        %v1682 = vld [vmem:[%s6] sm:$0x1]
        %1683 = vadd.xlane.f32.xlu0 %v1680
        %v1684 = vpop.xlane.xlu0 %1683
        %v1685 = vrcp.pop 128.0
        %v1686 = vmul.f32 %v1684, %v1685
        %v1687 = vsub.f32 %v1680, %v1686
        %v1688 = vmul.f32 %v1687, %v1687
        %1689 = vadd.xlane.f32.xlu0 %v1688
        %v1690 = vpop.xlane.xlu0 %1689
        %v1691 = vmul.f32 %v1690, %v1685
        %v1692 = vadd.f32 %v1691, 1e-05
        %v1693 = vrsqrt.pop %v1692
        %v1694 = vmul.f32 %v1687, %v1693
        %v1696 = vlaneseq
        %v1697 = vshrl.u32 %v1696, 7
        %v1698 = vsub.s32 0, %v1697
        %v1699 = vrot.slane %v1681, %v1698
        %v1701 = vmul.f32 %v1694, %v1699
        %v1703 = vlaneseq
        %v1704 = vshrl.u32 %v1703, 7
        %v1705 = vsub.s32 0, %v1704
        %v1706 = vrot.slane %v1682, %v1705
        %v1708 = vadd.f32 %v1701, %v1706
        %v1709 = vpack.c.bf16 %v1708, %v1708
        %v1710 = vld [vmem:[%s7] sm:$0xf]
        %v1711 = vld [vmem:[%s7 + $0x4] sm:$0xf]
        %v1712 = vld [vmem:[%s7 + $0x8] sm:$0xf]
        %v1713 = vld [vmem:[%s7 + $0xc] sm:$0xf]
        %v1714 = vld [vmem:[%s7 + $0x10] sm:$0xf]
        %v1715 = vld [vmem:[%s7 + $0x14] sm:$0xf]
        %v1716 = vld [vmem:[%s7 + $0x18] sm:$0xf]
        %v1717 = vld [vmem:[%s7 + $0x1c] sm:$0xf]
        %v1718 = vld [vmem:[%s7 + $0x20] sm:$0xf]
        %v1719 = vld [vmem:[%s7 + $0x24] sm:$0xf]
        %v1720 = vld [vmem:[%s7 + $0x28] sm:$0xf]
        %v1721 = vld [vmem:[%s7 + $0x2c] sm:$0xf]
        %v1722 = vld [vmem:[%s7 + $0x30] sm:$0xf]
        %v1723 = vld [vmem:[%s7 + $0x34] sm:$0xf]
        %v1724 = vld [vmem:[%s7 + $0x38] sm:$0xf]
        %v1725 = vld [vmem:[%s7 + $0x3c] sm:$0xf]
        %v1726 = vld [vmem:[%s8] sm:$0x1]
        %v1728 = vlaneseq
        %v1729 = vshrl.u32 %v1728, 7
        %v1730 = vsub.s32 0, %v1729
        %v1731 = vrot.slane %v1726, %v1730
        %v1749 = vunpack.c.l.b16 %v1710
        %v1750 = vunpack.c.l.b16 %v1711
        %v1751 = vunpack.c.l.b16 %v1712
        %v1752 = vunpack.c.l.b16 %v1713
        %v1753 = vunpack.c.l.b16 %v1714
        %v1754 = vunpack.c.l.b16 %v1715
        %v1755 = vunpack.c.l.b16 %v1716
        %v1756 = vunpack.c.l.b16 %v1717
        %v1757 = vunpack.c.l.b16 %v1718
        %v1758 = vunpack.c.l.b16 %v1719
        %v1759 = vunpack.c.l.b16 %v1720
        %v1760 = vunpack.c.l.b16 %v1721
        %v1761 = vunpack.c.l.b16 %v1722
        %v1762 = vunpack.c.l.b16 %v1723
        %v1763 = vunpack.c.l.b16 %v1724
        %v1764 = vunpack.c.l.b16 %v1725
        %v1765 = vpack.c.b16 %v1750, %v1749
        %v1766 = vpack.c.b16 %v1752, %v1751
        %v1767 = vpack.c.b16 %v1754, %v1753
        %v1768 = vpack.c.b16 %v1756, %v1755
        %v1769 = vpack.c.b16 %v1758, %v1757
        %v1770 = vpack.c.b16 %v1760, %v1759
        %v1771 = vpack.c.b16 %v1762, %v1761
        %v1772 = vpack.c.b16 %v1764, %v1763
        %1781 = vmatprep.subr.bf16.mxu0 0
        %1782 = vmatpush1.bf16.msra.mxu0 %v1772
        %1783 = vmatprep.subr.bf16.mxu0 0
        %1784 = vmatpush1.bf16.msra.mxu0 %v1771
        %1785 = vmatprep.subr.bf16.mxu0 0
        %1786 = vmatpush1.bf16.msra.mxu0 %v1770
        %1787 = vmatprep.subr.bf16.mxu0 0
        %1788 = vmatpush1.bf16.msra.mxu0 %v1769
        %1789 = vmatprep.subr.bf16.mxu0 0
        %1790 = vmatpush1.bf16.msra.mxu0 %v1768
        %1791 = vmatprep.subr.bf16.mxu0 0
        %1792 = vmatpush1.bf16.msra.mxu0 %v1767
        %1793 = vmatprep.subr.bf16.mxu0 0
        %1794 = vmatpush1.bf16.msra.mxu0 %v1766
        %1795 = vmatprep.subr.bf16.mxu0 0
        %1796 = vmatpush1.bf16.msra.mxu0 %v1765
        %1797 = vmatprep.subr.bf16.mxu0 0
        %1798 = vmatpush2.bf16.msra.mxu0 0
        %1799 = vmatprep.subr.bf16.mxu0 0
        %1800 = vmatpush2.bf16.msra.mxu0 0
        %1801 = vmatprep.subr.bf16.mxu0 0
        %1802 = vmatpush2.bf16.msra.mxu0 0
        %1803 = vmatprep.subr.bf16.mxu0 0
        %1804 = vmatpush2.bf16.msra.mxu0 0
        %1805 = vmatprep.subr.bf16.mxu0 0
        %1806 = vmatpush2.bf16.msra.mxu0 0
        %1807 = vmatprep.subr.bf16.mxu0 0
        %1808 = vmatpush2.bf16.msra.mxu0 0
        %1809 = vmatprep.subr.bf16.mxu0 0
        %1810 = vmatpush2.bf16.msra.mxu0 0
        %1811 = vmatprep.subr.bf16.mxu0 0
        %1812 = vmatpush2.bf16.msra.mxu0 0
        %1813 = vmatprep.mubr.bf16.mxu0 0
        %1814 = vmatmul.mubr.bf16.gmra.mxu0 %v1709
        %v1815 = vpop.f32.mrf.mxu0
        %v1816 = vadd.f32 %v1731, %v1815
        %v1817 = vpop.f32.mrf.mxu0
        %v1818 = vpop.f32.mrf.mxu0
        %v1819 = vpop.f32.mrf.mxu0
        %1820 = vdwg.mxu0
        %v1821 = vadd.f32 %v1816, %v1708
        %v1822 = vld [vmem:[%s9] sm:$0x1]
        %v1823 = vld [vmem:[%s10] sm:$0x1]
        %1824 = vadd.xlane.f32.xlu0 %v1821
        %v1825 = vpop.xlane.xlu0 %1824
        %v1826 = vmul.f32 %v1825, %v1685
        %v1827 = vsub.f32 %v1821, %v1826
        %v1828 = vmul.f32 %v1827, %v1827
        %1829 = vadd.xlane.f32.xlu0 %v1828
        %v1830 = vpop.xlane.xlu0 %1829
        %v1831 = vmul.f32 %v1830, %v1685
        %v1832 = vadd.f32 %v1831, 1e-05
        %v1833 = vrsqrt.pop %v1832
        %v1834 = vmul.f32 %v1827, %v1833
        %v1836 = vlaneseq
        %v1837 = vshrl.u32 %v1836, 7
        %v1838 = vsub.s32 0, %v1837
        %v1839 = vrot.slane %v1822, %v1838
        %v1841 = vmul.f32 %v1834, %v1839
        %v1843 = vlaneseq
        %v1844 = vshrl.u32 %v1843, 7
        %v1845 = vsub.s32 0, %v1844
        %v1846 = vrot.slane %v1823, %v1845
        %v1848 = vadd.f32 %v1841, %v1846
        %1849 = vst [vmem:[%s377] sm:$0xff] %v1848
        %s1850 = sand.u32 %s269, 1
        %s1851 = scalar_lea.sflag [#allocation3], %s1850
        %s1852 = sand.u32 %s269, 1
        %s1853 = smul.addr %s1852, 8
        %s1854 = scalar_lea.vmem [#allocation2], %s1853
        // Predicated region
        $region65: #{transformer_layer.1} parent=63 // pred_check
          %p1855 = pneg %p279
        $region66: #{transformer_layer.1} parent=63 // pred_check_branch
          %1857 = sbr.rel (%p1855) target = $region68
        $region67: #{transformer_layer.1} parent=63 // pred_region
          %s1859 = ssub.s32 128, 128
          %1860 = vsyncadd %s1851, %s1859
          %s1861 = smul.addr %s25, 128
          %s1862 = scalar_lea.hbm %s11, %s1861
          %s1864 = sshll.u32 %s1854, 4
          %s1865 = int_to_ptr.vmem [resolvable:$true] %s1864
          %1867 = dma.vmem_to_hbm [thread:$0]  %s1865, 128, %s1862, %s1851
        $region68: #{transformer_layer.1} parent=63 // pred_fallthru
          _
      $region64: #{transformer_layer.1} parent=5 // pred_fallthru
        _
      %p1868 = scmp.le.s32.totalorder 2, %s20
      // Predicated region
      $region69: #{transformer_layer.1} parent=5 // pred_check
        %p1869 = pneg %p1868
      $region70: #{transformer_layer.1} parent=5 // pred_check_branch
        %1871 = sbr.rel (%p1869) target = $region72
      $region71: #{transformer_layer.1} parent=5 // pred_region
        %s1872 = ssub.s32 %s20, 2
        // Predicated region
        $region73: #{transformer_layer.1} parent=71 // pred_check
          %p1873 = pneg %p285
        $region74: #{transformer_layer.1} parent=71 // pred_check_branch
          %1875 = sbr.rel (%p1873) target = $region76
        $region75: #{transformer_layer.1} parent=71 // pred_region
          %s1876 = sand.u32 %s270, 1
          %s1877 = scalar_lea.sflag [#allocation3], %s1876
          %s1878 = sand.u32 %s270, 1
          %s1879 = smul.addr %s1878, 8
          %s1880 = scalar_lea.vmem [#allocation2], %s1879
          %1881 = dma.done %s1877, 128
        $region76: #{transformer_layer.1} parent=71 // pred_fallthru
          _
      $region72: #{transformer_layer.1} parent=5 // pred_fallthru
        _
    $region6: #{transformer_layer.1} parent=1 // loop_footer
      %s24 = sadd.s32 1, %s20
    $region7: #{transformer_layer.1} parent=1 // loop_footer_branch
      %19 = sbr.rel target = $region3
    $region8: #{transformer_layer.1} parent=1 // loop_exit
      _
    %1882 = vsyncpa [#allocation3], 1
    %s1883 = scalar_lea.sflag [#allocation3], 1
    %1884 = vsyncpa %s1883, 1

</llo_original>
